<compile_context>
chip_gen: v6e
topology: v6e:2x2x1
jax: 0.10.0
libtpu: 0.0.40
codegen_flags: <defaults>
</compile_context>

<pallas_src>
import jax
import jax.numpy as jnp
from jax.experimental import pallas as pl
from jax.experimental.pallas import tpu as pltpu


def _make_attn_kernel(hp, tq, S):
    """hp = heads per grid step, tq = query rows per grid step."""

    def kernel(bias_ref, s_ref, v_ref, o_ref):
        # bias_ref : (1, S)        additive bias (shared, resident across steps)
        # s_ref    : (hp, tq, S)   scores row-tile for hp consecutive heads
        # v_ref    : (hp, S, D)    values (resident across the row axis)
        # o_ref    : (hp, tq, D)   output row-tile, stored in natural layout
        bias_b = jnp.broadcast_to(bias_ref[...], (tq, S))      # hoisted once
        for h in range(hp):                                    # unrolled at trace time
            s = s_ref[h] + bias_b                              # (tq, S)
            m = jnp.max(s, axis=-1, keepdims=True)
            p = jnp.exp(s - m)                                 # unnormalized probs (f32)
            denom = jnp.sum(p, axis=-1, keepdims=True)
            # bf16 operands -> single-pass MXU matmul, f32 accumulation.
            acc = jnp.dot(p.astype(jnp.bfloat16),
                          v_ref[h].astype(jnp.bfloat16),
                          preferred_element_type=jnp.float32)
            # Deferred softmax normalization: tq*D multiplies instead of tq*S.
            inv = pl.reciprocal(denom, approx=False)
            o_ref[h] = (acc * inv).astype(o_ref.dtype)         # direct slice-store

    return kernel


def add_softmax_dropout_matmul(scores, bias, values):
    """scores: [B,H,S,S] f32, bias: [1,1,1,S] f32, values: [B,H,S,D] f32."""
    B, H, S, S2 = scores.shape
    assert S == S2
    D = values.shape[-1]
    BH = B * H

    # Pair two heads per grid step when possible (halves head-axis steps).
    hp = 2 if BH % 2 == 0 else 1
    # Query-row tile: 2+ row steps so the first scores DMA is not a fully
    # exposed prologue and each v7x TensorCore gets >=2 steps to pipeline.
    if S % 192 == 0 and S > 192:
        tq = 192
    elif S % 128 == 0 and S > 128:
        tq = 128
    else:
        tq = S

    scores_f = scores.reshape(BH, S, S)
    values_f = values.reshape(BH, S, D)
    bias_f = bias.reshape(1, S)

    itemsize = 4  # f32
    cost = pl.CostEstimate(
        flops=2 * BH * S * S * D,
        transcendentals=BH * S * S,
        bytes_accessed=(scores_f.size + values_f.size + bias_f.size
                        + BH * S * D) * itemsize,
    )

    # TODO(synk): dropout(p=0.1) implemented as eval-mode identity (no mask /
    # rescale); training-mode parity would need pltpu.prng_* + 1/(1-p) rescale.
    out_f = pl.pallas_call(
        _make_attn_kernel(hp, tq, S),
        out_shape=jax.ShapeDtypeStruct((BH, S, D), scores.dtype),
        grid_spec=pltpu.PrefetchScalarGridSpec(
            num_scalar_prefetch=0,
            grid=(BH // hp, S // tq),
            in_specs=[
                pl.BlockSpec((1, S), lambda i, j: (0, 0)),           # bias (shared)
                pl.BlockSpec((hp, tq, S), lambda i, j: (i, j, 0)),   # scores row-tile
                pl.BlockSpec((hp, S, D), lambda i, j: (i, 0, 0)),    # values (resident in j)
            ],
            out_specs=pl.BlockSpec((hp, tq, D), lambda i, j: (i, j, 0)),
        ),
        compiler_params=pltpu.CompilerParams(
            dimension_semantics=("parallel", "parallel")),
        cost_estimate=cost,
    )(bias_f, scores_f, values_f)

    # Contiguous reshape only (no transpose / extra HBM pass).
    return out_f.reshape(B, H, S, D)


if __name__ == "__main__":
    # Exact module shapes: [1, 4, 384, 384] scores, [1, 4, 384, 64] values.
    B, H, S, D = 1, 4, 384, 64
    key = jax.random.PRNGKey(0)
    k1, k2, k3 = jax.random.split(key, 3)

    x470 = jax.random.normal(k1, (B, H, S, S), dtype=jnp.float32)   # scores
    x462 = jax.random.normal(k2, (B, H, S, D), dtype=jnp.float32)   # values
    # module's _tensor_constant20 ~ torch.rand([1,1,1,S]) -> uniform [0,1)
    bias = jax.random.uniform(k3, (1, 1, 1, S), dtype=jnp.float32)

    out = add_softmax_dropout_matmul(x470, bias, x462)
    out = jax.block_until_ready(out)

    # Reference check in plain JAX (f32 end-to-end).
    ref = jnp.matmul(jax.nn.softmax(x470 + bias, axis=-1), x462)
    assert out.shape == (B, H, S, D)
    # bf16 MXU operands -> relaxed tolerance vs f32 reference.
    assert jnp.allclose(out, ref, atol=2e-2, rtol=2e-2), \
        f"max abs err {jnp.max(jnp.abs(out - ref))}"

    print("KERNEL_OK")
</pallas_src>

<mosaic_0001>
module attributes {stable_mosaic.version = 11 : i64} {
  func.func @kernel(%arg0: i32, %arg1: i32, %arg2: memref<1x384xf32, #tpu.memory_space<vmem>>, %arg3: memref<2x192x384xf32, #tpu.memory_space<vmem>>, %arg4: memref<2x384x64xf32, #tpu.memory_space<vmem>>, %arg5: memref<2x192x64xf32, #tpu.memory_space<vmem>>) attributes {dimension_semantics = [#tpu.dimension_semantics<parallel>, #tpu.dimension_semantics<parallel>], iteration_bounds = array<i64: 2, 2>, scalar_prefetch = 0 : i64, scratch_operands = 0 : i64, tpu.core_type = #tpu.core_type<tc>, window_params = [{pipeline_mode = #tpu.pipeline_mode<synchronous>, transform_indices = @transform_0, window_bounds = array<i64: 1, 384>}, {transform_indices = @transform_1, window_bounds = array<i64: 2, 192, 384>}, {transform_indices = @transform_2, window_bounds = array<i64: 2, 384, 64>}, {transform_indices = @transform_3, window_bounds = array<i64: 2, 192, 64>}]} {
    %c0 = arith.constant 0 : index
    %c0_0 = arith.constant 0 : index
    %0 = vector.load %arg2[%c0, %c0_0] : memref<1x384xf32, #tpu.memory_space<vmem>>, vector<1x384xf32>
    %1 = vector.shape_cast %0 : vector<1x384xf32> to vector<1x384xf32>
    %2 = vector.broadcast %1 : vector<1x384xf32> to vector<192x384xf32>
    %c0_1 = arith.constant 0 : index
    %c0_2 = arith.constant 0 : index
    %c0_3 = arith.constant 0 : index
    %3 = vector.load %arg3[%c0_1, %c0_2, %c0_3] : memref<2x192x384xf32, #tpu.memory_space<vmem>>, vector<1x192x384xf32>
    %4 = vector.shape_cast %3 : vector<1x192x384xf32> to vector<192x384xf32>
    %5 = arith.addf %4, %2 : vector<192x384xf32>
    %cst = arith.constant dense<0xFF800000> : vector<192xf32>
    %6 = vector.multi_reduction <maximumf>, %5, %cst [1] : vector<192x384xf32> to vector<192xf32>
    %7 = vector.shape_cast %6 : vector<192xf32> to vector<192x1xf32>
    %8 = vector.broadcast %7 : vector<192x1xf32> to vector<192x384xf32>
    %9 = arith.subf %5, %8 : vector<192x384xf32>
    %10 = math.exp %9 : vector<192x384xf32>
    %cst_4 = arith.constant dense<0.000000e+00> : vector<192xf32>
    %11 = vector.multi_reduction <add>, %10, %cst_4 [1] : vector<192x384xf32> to vector<192xf32>
    %12 = vector.shape_cast %11 : vector<192xf32> to vector<192x1xf32>
    %13 = arith.truncf %10 : vector<192x384xf32> to vector<192x384xbf16>
    %c0_5 = arith.constant 0 : index
    %c0_6 = arith.constant 0 : index
    %c0_7 = arith.constant 0 : index
    %14 = vector.load %arg4[%c0_5, %c0_6, %c0_7] : memref<2x384x64xf32, #tpu.memory_space<vmem>>, vector<1x384x64xf32>
    %15 = vector.shape_cast %14 : vector<1x384x64xf32> to vector<384x64xf32>
    %16 = arith.truncf %15 : vector<384x64xf32> to vector<384x64xbf16>
    %cst_8 = arith.constant dense<0.000000e+00> : vector<192x64xf32>
    %17 = tpu.matmul %13, %16, %cst_8 {dimension_numbers = #tpu.dot_dimension_numbers<[1], [0], [0], [1], [0, 0, 1, 1], [], []>} : vector<192x384xbf16>, vector<384x64xbf16>, vector<192x64xf32> -> vector<192x64xf32>
    %18 = tpu.reciprocal %12 : vector<192x1xf32> -> vector<192x1xf32>
    %19 = vector.broadcast %18 : vector<192x1xf32> to vector<192x64xf32>
    %20 = arith.mulf %17, %19 : vector<192x64xf32>
    %c0_9 = arith.constant 0 : index
    %c0_10 = arith.constant 0 : index
    %c0_11 = arith.constant 0 : index
    %21 = vector.load %arg5[%c0_9, %c0_10, %c0_11] : memref<2x192x64xf32, #tpu.memory_space<vmem>>, vector<1x192x64xf32>
    %22 = vector.shape_cast %21 : vector<1x192x64xf32> to vector<192x64xf32>
    %23 = vector.shape_cast %20 : vector<192x64xf32> to vector<1x192x64xf32>
    tpu.vector_store %arg5[%c0_9, %c0_10, %c0_11], %23 {strides = array<i32>} : memref<2x192x64xf32, #tpu.memory_space<vmem>>, vector<1x192x64xf32>,
    %c1 = arith.constant 1 : index
    %c0_12 = arith.constant 0 : index
    %c0_13 = arith.constant 0 : index
    %24 = vector.load %arg3[%c1, %c0_12, %c0_13] : memref<2x192x384xf32, #tpu.memory_space<vmem>>, vector<1x192x384xf32>
    %25 = vector.shape_cast %24 : vector<1x192x384xf32> to vector<192x384xf32>
    %26 = arith.addf %25, %2 : vector<192x384xf32>
    %cst_14 = arith.constant dense<0xFF800000> : vector<192xf32>
    %27 = vector.multi_reduction <maximumf>, %26, %cst_14 [1] : vector<192x384xf32> to vector<192xf32>
    %28 = vector.shape_cast %27 : vector<192xf32> to vector<192x1xf32>
    %29 = vector.broadcast %28 : vector<192x1xf32> to vector<192x384xf32>
    %30 = arith.subf %26, %29 : vector<192x384xf32>
    %31 = math.exp %30 : vector<192x384xf32>
    %cst_15 = arith.constant dense<0.000000e+00> : vector<192xf32>
    %32 = vector.multi_reduction <add>, %31, %cst_15 [1] : vector<192x384xf32> to vector<192xf32>
    %33 = vector.shape_cast %32 : vector<192xf32> to vector<192x1xf32>
    %34 = arith.truncf %31 : vector<192x384xf32> to vector<192x384xbf16>
    %c1_16 = arith.constant 1 : index
    %c0_17 = arith.constant 0 : index
    %c0_18 = arith.constant 0 : index
    %35 = vector.load %arg4[%c1_16, %c0_17, %c0_18] : memref<2x384x64xf32, #tpu.memory_space<vmem>>, vector<1x384x64xf32>
    %36 = vector.shape_cast %35 : vector<1x384x64xf32> to vector<384x64xf32>
    %37 = arith.truncf %36 : vector<384x64xf32> to vector<384x64xbf16>
    %cst_19 = arith.constant dense<0.000000e+00> : vector<192x64xf32>
    %38 = tpu.matmul %34, %37, %cst_19 {dimension_numbers = #tpu.dot_dimension_numbers<[1], [0], [0], [1], [0, 0, 1, 1], [], []>} : vector<192x384xbf16>, vector<384x64xbf16>, vector<192x64xf32> -> vector<192x64xf32>
    %39 = tpu.reciprocal %33 : vector<192x1xf32> -> vector<192x1xf32>
    %40 = vector.broadcast %39 : vector<192x1xf32> to vector<192x64xf32>
    %41 = arith.mulf %38, %40 : vector<192x64xf32>
    %c1_20 = arith.constant 1 : index
    %c0_21 = arith.constant 0 : index
    %c0_22 = arith.constant 0 : index
    %42 = vector.load %arg5[%c1_20, %c0_21, %c0_22] : memref<2x192x64xf32, #tpu.memory_space<vmem>>, vector<1x192x64xf32>
    %43 = vector.shape_cast %42 : vector<1x192x64xf32> to vector<192x64xf32>
    %44 = vector.shape_cast %41 : vector<192x64xf32> to vector<1x192x64xf32>
    tpu.vector_store %arg5[%c1_20, %c0_21, %c0_22], %44 {strides = array<i32>} : memref<2x192x64xf32, #tpu.memory_space<vmem>>, vector<1x192x64xf32>,
    return
  }
  func.func @transform_0(%arg0: i32, %arg1: i32) -> (i32, i32) {
    %c0_i32 = arith.constant 0 : i32
    %c0_i32_0 = arith.constant 0 : i32
    %c0_i32_1 = arith.constant 0 : i32
    return %c0_i32, %c0_i32_0 : i32, i32
  }
  func.func @transform_1(%arg0: i32, %arg1: i32) -> (i32, i32, i32) {
    %c0_i32 = arith.constant 0 : i32
    %c0_i32_0 = arith.constant 0 : i32
    return %arg0, %arg1, %c0_i32 : i32, i32, i32
  }
  func.func @transform_2(%arg0: i32, %arg1: i32) -> (i32, i32, i32) {
    %c0_i32 = arith.constant 0 : i32
    %c0_i32_0 = arith.constant 0 : i32
    %c0_i32_1 = arith.constant 0 : i32
    return %arg0, %c0_i32, %c0_i32_0 : i32, i32, i32
  }
  func.func @transform_3(%arg0: i32, %arg1: i32) -> (i32, i32, i32) {
    %c0_i32 = arith.constant 0 : i32
    %c0_i32_0 = arith.constant 0 : i32
    return %arg0, %arg1, %c0_i32 : i32, i32, i32
  }
}

</mosaic_0001>

<llo_original>
// kernel: tpu_custom_call.1
$region0: #{tpu_custom_call.1}
  #allocation0 [shape = 'u32[]', space=smem, size = 0x4, offset = 0x4, fixed_abs, tag = 'smem constant byte address 0x4 - core index']
  #allocation1 [shape = 'u32[144,128]{1,0:T(1,128)}', space=vmem, size = 0x12000, scoped, tag = 'internal scratch']
  #allocation7 [shape = 's32[]', space=sflag, size = 0x4, offset = 0, fixed_abs, tag = 'sflag constant byte address 0x0 - dummy sync flag']
  %s0 = inlined_call_operand.hbm [shape: f32[1,384], index: 0, kind: input, shape index: {}]
  %s1 = inlined_call_operand.hbm [shape: f32[4,384,384], index: 1, kind: input, shape index: {}]
  %s2 = inlined_call_operand.vmem [shape: f32[4,384,64], index: 2, kind: input, shape index: {}]
  %s3 = inlined_call_operand.vmem [shape: f32[4,384,64], index: 3, kind: output, shape index: {}]
  %s4 = sld [smem:[#allocation0]]
  $region87: #{tpu_custom_call.1} parent=0
    _
  %s6 = ssub.s32 1, %s4
  %s7 = scalar_select 0, %s6, %s4
  $region1: #{tpu_custom_call.1} parent=0
    #allocation2 [shape = 'u8[1536]{0}', space=vmem, size = 0x800, scoped, tag = 'input window, operand 0, single buffered']
    #allocation3 [shape = 's32[2]{0}', space=sflag, size = 0x8, scoped, tag = 'scoped memory for tpu_custom_call.1']
    #allocation4 [shape = 'u8[1179648]{0}', space=vmem, size = 0x120000, scoped, tag = 'input window, operand 1']
    #allocation5 [shape = 's32[2]{0}', space=sflag, size = 0x8, scoped, tag = 'scoped memory for tpu_custom_call.1']
    #allocation6 [shape = 'u8[393216]{0}', space=vmem, size = 0x60000, scoped, tag = 'output window, operand 0']
    %8 = vsyncpa [#allocation3], 0
    %9 = vsyncpa [#allocation5], 0
    %s10 = scalar_lea.sflag [#allocation5], 1
    %11 = vsyncpa %s10, 0
    loop: start=0, step=1, limit=6
    $region2: #{tpu_custom_call.1} parent=1 // loop_pre_header
      _
    $region3: #{tpu_custom_call.1} parent=1 // loop_header
      %s13 = sphi 0, %s17
      %p14 = scmp.ge.s32.totalorder %s13, 6
      %s20 = sphi 0, %s32
      %s21 = sphi 0, %s28
      %s22 = sphi 0, %s20
      %s23 = sphi 0, %s21
      %s24 = sphi 0, %s22
      %s25 = sphi 0, %s23
      %s33 = sphi 0, %s33
      %s35 = sphi 0, %s33
      %s36 = sphi 0, %s35
      %s50 = sphi 0, %s36
      %s58 = sphi 0, %s60
      %s61 = sphi 0, %s58
      %s62 = sphi 0, %s61
      %s78 = sphi 0, %s62
      %s84 = sphi 0, %s86
      %s87 = sphi 0, %s84
      %s88 = sphi 0, %s87
      %s104 = sphi 0, %s88
      %s112 = sphi 0, %s114
      %s115 = sphi 0, %s112
      %s116 = sphi 0, %s115
      %s132 = sphi 0, %s116
    $region4: #{tpu_custom_call.1} parent=1 // loop_header_branch
      %16 = sbr.rel (%p14) target = $region8
    $region5: #{tpu_custom_call.1} parent=1 // loop_body
      %s18 = ssub.s32 %s13, 1
      %s19 = ssub.s32 %s13, 2
      %s26 = sadd.s32 1, %s21
      %p27 = scmp.ge.s32.totalorder %s26, 2
      %s28 = scalar_select %p27, 0, %s26
      %s29 = sadd.s32 1, %s20
      %s30 = scalar_select %p27, %s29, %s20
      %p31 = scmp.ge.s32.totalorder %s30, 2
      %s32 = scalar_select %p31, 0, %s30
      %s34 = sadd.s32 %s33, 1
      %p37 = scmp.eq.s32.totalorder %s13, 3
      %p38 = scmp.ne.s32.totalorder %s33, %s35
      %p39 = scmp.eq.s32.totalorder %s13, 0
      %p40 = por %p38, %p39
      %p41 = scmp.ne.s32.totalorder %s33, %s35
      %p42 = scmp.eq.s32.totalorder %s18, 3
      %p43 = por %p41, %p42
      %p44 = scmp.ne.s32.totalorder %s35, %s36
      %p45 = scmp.eq.s32.totalorder %s18, 0
      %p46 = por %p44, %p45
      %p47 = scmp.ne.s32.totalorder %s35, %s36
      %p48 = scmp.eq.s32.totalorder %s19, 3
      %p49 = por %p47, %p48
      %p51 = scmp.ne.s32.totalorder %s36, %s50
      %p52 = scmp.eq.s32.totalorder %s19, 0
      %p53 = por %p51, %p52
      %s54 = ssub.s32 %s20, %s32
      %s55 = ssub.s32 %s21, %s28
      %s56 = sor.u32 %s54, %s55
      %p57 = scmp.eq.s32.totalorder %s56, 0
      %s59 = sadd.s32 %s58, 1
      %s60 = scalar_select %p57, %s58, %s59
      %p63 = pneg %p57
      %p64 = scmp.eq.s32.totalorder %s13, 3
      %p65 = por %p63, %p64
      %p66 = scmp.ne.s32.totalorder %s58, %s61
      %p67 = scmp.eq.s32.totalorder %s13, 0
      %p68 = por %p66, %p67
      %p69 = scmp.ne.s32.totalorder %s58, %s61
      %p70 = scmp.eq.s32.totalorder %s18, 3
      %p71 = por %p69, %p70
      %p72 = scmp.ne.s32.totalorder %s61, %s62
      %p73 = scmp.eq.s32.totalorder %s18, 0
      %p74 = por %p72, %p73
      %p75 = scmp.ne.s32.totalorder %s61, %s62
      %p76 = scmp.eq.s32.totalorder %s19, 3
      %p77 = por %p75, %p76
      %p79 = scmp.ne.s32.totalorder %s62, %s78
      %p80 = scmp.eq.s32.totalorder %s19, 0
      %p81 = por %p79, %p80
      %s82 = ssub.s32 %s20, %s32
      %p83 = scmp.eq.s32.totalorder %s82, 0
      %s85 = sadd.s32 %s84, 1
      %s86 = scalar_select %p83, %s84, %s85
      %p89 = pneg %p83
      %p90 = scmp.eq.s32.totalorder %s13, 3
      %p91 = por %p89, %p90
      %p92 = scmp.ne.s32.totalorder %s84, %s87
      %p93 = scmp.eq.s32.totalorder %s13, 0
      %p94 = por %p92, %p93
      %p95 = scmp.ne.s32.totalorder %s84, %s87
      %p96 = scmp.eq.s32.totalorder %s18, 3
      %p97 = por %p95, %p96
      %p98 = scmp.ne.s32.totalorder %s87, %s88
      %p99 = scmp.eq.s32.totalorder %s18, 0
      %p100 = por %p98, %p99
      %p101 = scmp.ne.s32.totalorder %s87, %s88
      %p102 = scmp.eq.s32.totalorder %s19, 3
      %p103 = por %p101, %p102
      %p105 = scmp.ne.s32.totalorder %s88, %s104
      %p106 = scmp.eq.s32.totalorder %s19, 0
      %p107 = por %p105, %p106
      %s108 = ssub.s32 %s20, %s32
      %s109 = ssub.s32 %s21, %s28
      %s110 = sor.u32 %s108, %s109
      %p111 = scmp.eq.s32.totalorder %s110, 0
      %s113 = sadd.s32 %s112, 1
      %s114 = scalar_select %p111, %s112, %s113
      %p117 = pneg %p111
      %p118 = scmp.eq.s32.totalorder %s13, 3
      %p119 = por %p117, %p118
      %p120 = scmp.ne.s32.totalorder %s112, %s115
      %p121 = scmp.eq.s32.totalorder %s13, 0
      %p122 = por %p120, %p121
      %p123 = scmp.ne.s32.totalorder %s112, %s115
      %p124 = scmp.eq.s32.totalorder %s18, 3
      %p125 = por %p123, %p124
      %p126 = scmp.ne.s32.totalorder %s115, %s116
      %p127 = scmp.eq.s32.totalorder %s18, 0
      %p128 = por %p126, %p127
      %p129 = scmp.ne.s32.totalorder %s115, %s116
      %p130 = scmp.eq.s32.totalorder %s19, 3
      %p131 = por %p129, %p130
      %p133 = scmp.ne.s32.totalorder %s116, %s132
      %p134 = scmp.eq.s32.totalorder %s19, 0
      %p135 = por %p133, %p134
      %p136 = scmp.le.s32.totalorder 1, %s13
      %p137 = scmp.lt.s32.totalorder %s13, 5
      %p138 = pnand %p136, %p137
      %p139 = pneg %p138
      // Predicated region
      $region9: #{tpu_custom_call.1} parent=5 // pred_check
        _
      $region10: #{tpu_custom_call.1} parent=5 // pred_check_branch
        %141 = sbr.rel (%p138) target = $region12
      $region11: #{tpu_custom_call.1} parent=5 // pred_region
        %s142 = ssub.s32 %s13, 1
        // Predicated region
        $region13: #{tpu_custom_call.1} parent=11 // pred_check
          %p143 = pneg %p46
        $region14: #{tpu_custom_call.1} parent=11 // pred_check_branch
          %145 = sbr.rel (%p143) target = $region16
        $region15: #{tpu_custom_call.1} parent=11 // pred_region
          %s147 = ssub.s32 48, 48
          %148 = vsyncadd [#allocation3], %s147
          %s150 = sshll.u32 [#allocation2], 4
          %s151 = int_to_ptr.vmem [resolvable:$true] %s150
          %153 = dma.hbm_to_vmem [thread:$0]  %s0, 48, %s151, [#allocation3]
        $region16: #{tpu_custom_call.1} parent=11 // pred_fallthru
          _
      $region12: #{tpu_custom_call.1} parent=5 // pred_fallthru
        _
      %p154 = scmp.lt.s32.totalorder %s13, 4
      // Predicated region
      $region17: #{tpu_custom_call.1} parent=5 // pred_check
        %p155 = pneg %p154
      $region18: #{tpu_custom_call.1} parent=5 // pred_check_branch
        %157 = sbr.rel (%p155) target = $region20
      $region19: #{tpu_custom_call.1} parent=5 // pred_region
        // Predicated region
        $region21: #{tpu_custom_call.1} parent=19 // pred_check
          %p158 = pneg %p68
        $region22: #{tpu_custom_call.1} parent=19 // pred_check_branch
          %160 = sbr.rel (%p158) target = $region24
        $region23: #{tpu_custom_call.1} parent=19 // pred_region
          #allocation8 [shape = 'u32[6]{0}', space=smem, size = 0x18, scoped, tag = 'DMA stride descriptor']
          %s161 = sand.u32 %s58, 1
          %s162 = scalar_lea.sflag [#allocation5], %s161
          %s163 = sand.u32 %s58, 1
          %s164 = smul.addr %s163, 1152
          %s165 = scalar_lea.vmem [#allocation4], %s164
          %s166 = smul.u32 2, %s20
          %s167 = smul.u32 24, %s21
          %s169 = ssub.s32 18432, 18432
          %170 = vsyncadd %s162, %s169
          %s171 = smul.addr %s167, 3
          %s172 = smul.addr %s166, 144
          %s173 = sadd.s32 %s171, %s172
          %s174 = smul.addr %s173, 128
          %s175 = scalar_lea.hbm %s1, %s174
          %s177 = sshll.u32 1, 14
          %s178 = sxor.u32 4294967295, %s177
          %s180 = sld [smem:[#allocation0]]
          %s181 = sadd.s32 2, %s180
          %s183 = sshll.u32 7, 26
          %s184 = sxor.u32 4294967295, %s183
          %s185 = sand.u32 0, %s184
          %s186 = sshll.u32 %s181, 26
          %s187 = sor.u32 %s185, %s186
          %s188 = sshll.u32 %s165, 4
          %s189 = int_to_ptr.vmem [resolvable:$true] %s188
          %195 = sst [smem:[#allocation8]] 18432
          %s196 = scalar_lea.smem [#allocation8], 1
          %197 = sst [smem:[%s196]] 9216
          %s198 = scalar_lea.smem [#allocation8], 2
          %199 = sst [smem:[%s198]] 24
          %s200 = scalar_lea.smem [#allocation8], 3
          %201 = sst [smem:[%s200]] 384
          %s202 = scalar_lea.smem [#allocation8], 4
          %203 = sst [smem:[%s202]] 384
          %s204 = scalar_lea.smem [#allocation8], 5
          %205 = sst [smem:[%s204]] 24
          %207 = dma.general %s175, 18432, %s189, %s162, 131072, [#allocation8], %s187, 0
        $region24: #{tpu_custom_call.1} parent=19 // pred_fallthru
          _
        // Predicated region
        $region25: #{tpu_custom_call.1} parent=19 // pred_check
          %p208 = pneg %p94
        $region26: #{tpu_custom_call.1} parent=19 // pred_check_branch
          %210 = sbr.rel (%p208) target = $region28
        $region27: #{tpu_custom_call.1} parent=19 // pred_region
          %s211 = smul.u32 2, %s20
          %p212 = scmp.lt.s32.totalorder %s211, 3
          %s213 = scalar_select %p212, %s211, 3
          %s214 = smul.addr %s213, 48
          %s215 = smul.addr %s214, 8
          %s216 = scalar_lea.vmem %s2, %s215
          %s217 = smul.u32 2, %s20
        $region28: #{tpu_custom_call.1} parent=19 // pred_fallthru
          _
      $region20: #{tpu_custom_call.1} parent=5 // pred_fallthru
        _
      %p218 = scmp.le.s32.totalorder 1, %s13
      %p219 = scmp.lt.s32.totalorder %s13, 5
      %p220 = pnand %p218, %p219
      %p221 = pneg %p220
      // Predicated region
      $region29: #{tpu_custom_call.1} parent=5 // pred_check
        _
      $region30: #{tpu_custom_call.1} parent=5 // pred_check_branch
        %223 = sbr.rel (%p220) target = $region32
      $region31: #{tpu_custom_call.1} parent=5 // pred_region
        %s224 = ssub.s32 %s13, 1
        // Predicated region
        $region33: #{tpu_custom_call.1} parent=31 // pred_check
          %p225 = pneg %p46
        $region34: #{tpu_custom_call.1} parent=31 // pred_check_branch
          %227 = sbr.rel (%p225) target = $region36
        $region35: #{tpu_custom_call.1} parent=31 // pred_region
          %228 = dma.done [#allocation3], 48
        $region36: #{tpu_custom_call.1} parent=31 // pred_fallthru
          _
        %s229 = sand.u32 %s61, 1
        %s230 = scalar_lea.sflag [#allocation5], %s229
        %s231 = sand.u32 %s61, 1
        %s232 = smul.addr %s231, 1152
        %s233 = scalar_lea.vmem [#allocation4], %s232
        // Predicated region
        $region37: #{tpu_custom_call.1} parent=31 // pred_check
          %p234 = pneg %p74
        $region38: #{tpu_custom_call.1} parent=31 // pred_check_branch
          %236 = sbr.rel (%p234) target = $region40
        $region39: #{tpu_custom_call.1} parent=31 // pred_region
          %237 = dma.done %s230, 18432
        $region40: #{tpu_custom_call.1} parent=31 // pred_fallthru
          _
        %p238 = pneg %p46
        %p239 = pneg %p43
        %s240 = sand.u32 %s61, 1
        %s241 = scalar_lea.sflag [#allocation5], %s240
        %s242 = sand.u32 %s61, 1
        %s243 = smul.addr %s242, 1152
        %s244 = scalar_lea.vmem [#allocation4], %s243
        %p245 = pneg %p74
        %p246 = pneg %p71
        %s247 = smul.u32 2, %s22
        %p248 = scmp.lt.s32.totalorder %s247, 3
        %s249 = scalar_select %p248, %s247, 3
        %s250 = smul.addr %s249, 48
        %s251 = smul.addr %s250, 8
        %s252 = scalar_lea.vmem %s2, %s251
        %p253 = pneg %p100
        %p254 = pneg %p97
        %p255 = pneg %p128
        %p256 = pneg %p125
        %s257 = sand.u32 %s115, 1
        %s258 = sand.u32 %s115, 1
        %s259 = smul.addr %s258, 384
        %s260 = scalar_lea.vmem [#allocation6], %s259
        %s261 = smul.u32 2, %s22
        %s262 = smul.u32 24, %s23
        %s263 = smul.u32 2, %s22
        %p264 = scmp.lt.s32.totalorder %s263, 3
        %s265 = scalar_select %p264, %s263, 3
        %s266 = smul.addr %s265, 48
        %s267 = smul.addr %s266, 8
        %s268 = scalar_lea.vmem %s2, %s267
        %s269 = smul.u32 2, %s22
        %s270 = smul.u32 2, %s22
        %s271 = smul.u32 24, %s23
        %v273 = vld [vmem:[#allocation2] sm:$0x7]
        %v275 = vlaneseq
        %v276 = vshrl.u32 %v275, 7
        %v277 = vsub.s32 0, %v276
        %v278 = vrot.slane %v273, %v277
        %v279 = vlaneseq
        %v280 = vshrl.u32 %v279, 7
        %v281 = vsub.s32 1, %v280
        %v282 = vrot.slane %v273, %v281
        %v283 = vlaneseq
        %v284 = vshrl.u32 %v283, 7
        %v285 = vsub.s32 2, %v284
        %v286 = vrot.slane %v273, %v285
        %v290 = vld [vmem:[%s233] sm:$0xff]
        %v291 = vld [vmem:[%s233 + $0x8] sm:$0xff]
        %v292 = vld [vmem:[%s233 + $0x10] sm:$0xff]
        %v293 = vld [vmem:[%s233 + $0x18] sm:$0xff]
        %v294 = vld [vmem:[%s233 + $0x20] sm:$0xff]
        %v295 = vld [vmem:[%s233 + $0x28] sm:$0xff]
        %v296 = vld [vmem:[%s233 + $0x30] sm:$0xff]
        %v297 = vld [vmem:[%s233 + $0x38] sm:$0xff]
        %v298 = vld [vmem:[%s233 + $0x40] sm:$0xff]
        %v299 = vld [vmem:[%s233 + $0x48] sm:$0xff]
        %v300 = vld [vmem:[%s233 + $0x50] sm:$0xff]
        %v301 = vld [vmem:[%s233 + $0x58] sm:$0xff]
        %v302 = vld [vmem:[%s233 + $0x60] sm:$0xff]
        %v303 = vld [vmem:[%s233 + $0x68] sm:$0xff]
        %v304 = vld [vmem:[%s233 + $0x70] sm:$0xff]
        %v305 = vld [vmem:[%s233 + $0x78] sm:$0xff]
        %v306 = vld [vmem:[%s233 + $0x80] sm:$0xff]
        %v307 = vld [vmem:[%s233 + $0x88] sm:$0xff]
        %v308 = vld [vmem:[%s233 + $0x90] sm:$0xff]
        %v309 = vld [vmem:[%s233 + $0x98] sm:$0xff]
        %v310 = vld [vmem:[%s233 + $0xa0] sm:$0xff]
        %v311 = vld [vmem:[%s233 + $0xa8] sm:$0xff]
        %v312 = vld [vmem:[%s233 + $0xb0] sm:$0xff]
        %v313 = vld [vmem:[%s233 + $0xb8] sm:$0xff]
        %v314 = vld [vmem:[%s233 + $0xc0] sm:$0xff]
        %v315 = vld [vmem:[%s233 + $0xc8] sm:$0xff]
        %v316 = vld [vmem:[%s233 + $0xd0] sm:$0xff]
        %v317 = vld [vmem:[%s233 + $0xd8] sm:$0xff]
        %v318 = vld [vmem:[%s233 + $0xe0] sm:$0xff]
        %v319 = vld [vmem:[%s233 + $0xe8] sm:$0xff]
        %v320 = vld [vmem:[%s233 + $0xf0] sm:$0xff]
        %v321 = vld [vmem:[%s233 + $0xf8] sm:$0xff]
        %v322 = vld [vmem:[%s233 + $0x100] sm:$0xff]
        %v323 = vld [vmem:[%s233 + $0x108] sm:$0xff]
        %v324 = vld [vmem:[%s233 + $0x110] sm:$0xff]
        %v325 = vld [vmem:[%s233 + $0x118] sm:$0xff]
        %v326 = vld [vmem:[%s233 + $0x120] sm:$0xff]
        %v327 = vld [vmem:[%s233 + $0x128] sm:$0xff]
        %v328 = vld [vmem:[%s233 + $0x130] sm:$0xff]
        %v329 = vld [vmem:[%s233 + $0x138] sm:$0xff]
        %v330 = vld [vmem:[%s233 + $0x140] sm:$0xff]
        %v331 = vld [vmem:[%s233 + $0x148] sm:$0xff]
        %v332 = vld [vmem:[%s233 + $0x150] sm:$0xff]
        %v333 = vld [vmem:[%s233 + $0x158] sm:$0xff]
        %v334 = vld [vmem:[%s233 + $0x160] sm:$0xff]
        %v335 = vld [vmem:[%s233 + $0x168] sm:$0xff]
        %v336 = vld [vmem:[%s233 + $0x170] sm:$0xff]
        %v337 = vld [vmem:[%s233 + $0x178] sm:$0xff]
        %v338 = vld [vmem:[%s233 + $0x180] sm:$0xff]
        %v339 = vld [vmem:[%s233 + $0x188] sm:$0xff]
        %v340 = vld [vmem:[%s233 + $0x190] sm:$0xff]
        %v341 = vld [vmem:[%s233 + $0x198] sm:$0xff]
        %v342 = vld [vmem:[%s233 + $0x1a0] sm:$0xff]
        %v343 = vld [vmem:[%s233 + $0x1a8] sm:$0xff]
        %v344 = vld [vmem:[%s233 + $0x1b0] sm:$0xff]
        %v345 = vld [vmem:[%s233 + $0x1b8] sm:$0xff]
        %v346 = vld [vmem:[%s233 + $0x1c0] sm:$0xff]
        %v347 = vld [vmem:[%s233 + $0x1c8] sm:$0xff]
        %v348 = vld [vmem:[%s233 + $0x1d0] sm:$0xff]
        %v349 = vld [vmem:[%s233 + $0x1d8] sm:$0xff]
        %v350 = vld [vmem:[%s233 + $0x1e0] sm:$0xff]
        %v351 = vld [vmem:[%s233 + $0x1e8] sm:$0xff]
        %v352 = vld [vmem:[%s233 + $0x1f0] sm:$0xff]
        %v353 = vld [vmem:[%s233 + $0x1f8] sm:$0xff]
        %v354 = vld [vmem:[%s233 + $0x200] sm:$0xff]
        %v355 = vld [vmem:[%s233 + $0x208] sm:$0xff]
        %v356 = vld [vmem:[%s233 + $0x210] sm:$0xff]
        %v357 = vld [vmem:[%s233 + $0x218] sm:$0xff]
        %v358 = vld [vmem:[%s233 + $0x220] sm:$0xff]
        %v359 = vld [vmem:[%s233 + $0x228] sm:$0xff]
        %v360 = vld [vmem:[%s233 + $0x230] sm:$0xff]
        %v361 = vld [vmem:[%s233 + $0x238] sm:$0xff]
        %v362 = vadd.f32 %v290, %v278
        %v363 = vadd.f32 %v291, %v282
        %v364 = vadd.f32 %v292, %v286
        %v365 = vadd.f32 %v293, %v278
        %v366 = vadd.f32 %v294, %v282
        %v367 = vadd.f32 %v295, %v286
        %v368 = vadd.f32 %v296, %v278
        %v369 = vadd.f32 %v297, %v282
        %v370 = vadd.f32 %v298, %v286
        %v371 = vadd.f32 %v299, %v278
        %v372 = vadd.f32 %v300, %v282
        %v373 = vadd.f32 %v301, %v286
        %v374 = vadd.f32 %v302, %v278
        %v375 = vadd.f32 %v303, %v282
        %v376 = vadd.f32 %v304, %v286
        %v377 = vadd.f32 %v305, %v278
        %v378 = vadd.f32 %v306, %v282
        %v379 = vadd.f32 %v307, %v286
        %v380 = vadd.f32 %v308, %v278
        %v381 = vadd.f32 %v309, %v282
        %v382 = vadd.f32 %v310, %v286
        %v383 = vadd.f32 %v311, %v278
        %v384 = vadd.f32 %v312, %v282
        %v385 = vadd.f32 %v313, %v286
        %v386 = vadd.f32 %v314, %v278
        %v387 = vadd.f32 %v315, %v282
        %v388 = vadd.f32 %v316, %v286
        %v389 = vadd.f32 %v317, %v278
        %v390 = vadd.f32 %v318, %v282
        %v391 = vadd.f32 %v319, %v286
        %v392 = vadd.f32 %v320, %v278
        %v393 = vadd.f32 %v321, %v282
        %v394 = vadd.f32 %v322, %v286
        %v395 = vadd.f32 %v323, %v278
        %v396 = vadd.f32 %v324, %v282
        %v397 = vadd.f32 %v325, %v286
        %v398 = vadd.f32 %v326, %v278
        %v399 = vadd.f32 %v327, %v282
        %v400 = vadd.f32 %v328, %v286
        %v401 = vadd.f32 %v329, %v278
        %v402 = vadd.f32 %v330, %v282
        %v403 = vadd.f32 %v331, %v286
        %v404 = vadd.f32 %v332, %v278
        %v405 = vadd.f32 %v333, %v282
        %v406 = vadd.f32 %v334, %v286
        %v407 = vadd.f32 %v335, %v278
        %v408 = vadd.f32 %v336, %v282
        %v409 = vadd.f32 %v337, %v286
        %v410 = vadd.f32 %v338, %v278
        %v411 = vadd.f32 %v339, %v282
        %v412 = vadd.f32 %v340, %v286
        %v413 = vadd.f32 %v341, %v278
        %v414 = vadd.f32 %v342, %v282
        %v415 = vadd.f32 %v343, %v286
        %v416 = vadd.f32 %v344, %v278
        %v417 = vadd.f32 %v345, %v282
        %v418 = vadd.f32 %v346, %v286
        %v419 = vadd.f32 %v347, %v278
        %v420 = vadd.f32 %v348, %v282
        %v421 = vadd.f32 %v349, %v286
        %v422 = vadd.f32 %v350, %v278
        %v423 = vadd.f32 %v351, %v282
        %v424 = vadd.f32 %v352, %v286
        %v425 = vadd.f32 %v353, %v278
        %v426 = vadd.f32 %v354, %v282
        %v427 = vadd.f32 %v355, %v286
        %v428 = vadd.f32 %v356, %v278
        %v429 = vadd.f32 %v357, %v282
        %v430 = vadd.f32 %v358, %v286
        %v431 = vadd.f32 %v359, %v278
        %v432 = vadd.f32 %v360, %v282
        %v433 = vadd.f32 %v361, %v286
        %v434 = vmax.f32 %v362, %v363
        %v435 = vmax.f32 %v434, %v364
        %436 = vmax.xlane.f32.xlu0 %v435
        %v437 = vpop.xlane.xlu0 %436
        %v438 = vmax.f32 %v365, %v366
        %v439 = vmax.f32 %v438, %v367
        %440 = vmax.xlane.f32.xlu0 %v439
        %v441 = vpop.xlane.xlu0 %440
        %v442 = vmax.f32 %v368, %v369
        %v443 = vmax.f32 %v442, %v370
        %444 = vmax.xlane.f32.xlu0 %v443
        %v445 = vpop.xlane.xlu0 %444
        %v446 = vmax.f32 %v371, %v372
        %v447 = vmax.f32 %v446, %v373
        %448 = vmax.xlane.f32.xlu0 %v447
        %v449 = vpop.xlane.xlu0 %448
        %v450 = vmax.f32 %v374, %v375
        %v451 = vmax.f32 %v450, %v376
        %452 = vmax.xlane.f32.xlu0 %v451
        %v453 = vpop.xlane.xlu0 %452
        %v454 = vmax.f32 %v377, %v378
        %v455 = vmax.f32 %v454, %v379
        %456 = vmax.xlane.f32.xlu0 %v455
        %v457 = vpop.xlane.xlu0 %456
        %v458 = vmax.f32 %v380, %v381
        %v459 = vmax.f32 %v458, %v382
        %460 = vmax.xlane.f32.xlu0 %v459
        %v461 = vpop.xlane.xlu0 %460
        %v462 = vmax.f32 %v383, %v384
        %v463 = vmax.f32 %v462, %v385
        %464 = vmax.xlane.f32.xlu0 %v463
        %v465 = vpop.xlane.xlu0 %464
        %v466 = vmax.f32 %v386, %v387
        %v467 = vmax.f32 %v466, %v388
        %468 = vmax.xlane.f32.xlu0 %v467
        %v469 = vpop.xlane.xlu0 %468
        %v470 = vmax.f32 %v389, %v390
        %v471 = vmax.f32 %v470, %v391
        %472 = vmax.xlane.f32.xlu0 %v471
        %v473 = vpop.xlane.xlu0 %472
        %v474 = vmax.f32 %v392, %v393
        %v475 = vmax.f32 %v474, %v394
        %476 = vmax.xlane.f32.xlu0 %v475
        %v477 = vpop.xlane.xlu0 %476
        %v478 = vmax.f32 %v395, %v396
        %v479 = vmax.f32 %v478, %v397
        %480 = vmax.xlane.f32.xlu0 %v479
        %v481 = vpop.xlane.xlu0 %480
        %v482 = vmax.f32 %v398, %v399
        %v483 = vmax.f32 %v482, %v400
        %484 = vmax.xlane.f32.xlu0 %v483
        %v485 = vpop.xlane.xlu0 %484
        %v486 = vmax.f32 %v401, %v402
        %v487 = vmax.f32 %v486, %v403
        %488 = vmax.xlane.f32.xlu0 %v487
        %v489 = vpop.xlane.xlu0 %488
        %v490 = vmax.f32 %v404, %v405
        %v491 = vmax.f32 %v490, %v406
        %492 = vmax.xlane.f32.xlu0 %v491
        %v493 = vpop.xlane.xlu0 %492
        %v494 = vmax.f32 %v407, %v408
        %v495 = vmax.f32 %v494, %v409
        %496 = vmax.xlane.f32.xlu0 %v495
        %v497 = vpop.xlane.xlu0 %496
        %v498 = vmax.f32 %v410, %v411
        %v499 = vmax.f32 %v498, %v412
        %500 = vmax.xlane.f32.xlu0 %v499
        %v501 = vpop.xlane.xlu0 %500
        %v502 = vmax.f32 %v413, %v414
        %v503 = vmax.f32 %v502, %v415
        %504 = vmax.xlane.f32.xlu0 %v503
        %v505 = vpop.xlane.xlu0 %504
        %v506 = vmax.f32 %v416, %v417
        %v507 = vmax.f32 %v506, %v418
        %508 = vmax.xlane.f32.xlu0 %v507
        %v509 = vpop.xlane.xlu0 %508
        %v510 = vmax.f32 %v419, %v420
        %v511 = vmax.f32 %v510, %v421
        %512 = vmax.xlane.f32.xlu0 %v511
        %v513 = vpop.xlane.xlu0 %512
        %v514 = vmax.f32 %v422, %v423
        %v515 = vmax.f32 %v514, %v424
        %516 = vmax.xlane.f32.xlu0 %v515
        %v517 = vpop.xlane.xlu0 %516
        %v518 = vmax.f32 %v425, %v426
        %v519 = vmax.f32 %v518, %v427
        %520 = vmax.xlane.f32.xlu0 %v519
        %v521 = vpop.xlane.xlu0 %520
        %v522 = vmax.f32 %v428, %v429
        %v523 = vmax.f32 %v522, %v430
        %524 = vmax.xlane.f32.xlu0 %v523
        %v525 = vpop.xlane.xlu0 %524
        %v526 = vmax.f32 %v431, %v432
        %v527 = vmax.f32 %v526, %v433
        %528 = vmax.xlane.f32.xlu0 %v527
        %v529 = vpop.xlane.xlu0 %528
        %v530 = vsub.f32 %v362, %v437
        %v531 = vsub.f32 %v363, %v437
        %v532 = vsub.f32 %v364, %v437
        %v533 = vsub.f32 %v365, %v441
        %v534 = vsub.f32 %v366, %v441
        %v535 = vsub.f32 %v367, %v441
        %v536 = vsub.f32 %v368, %v445
        %v537 = vsub.f32 %v369, %v445
        %v538 = vsub.f32 %v370, %v445
        %v539 = vsub.f32 %v371, %v449
        %v540 = vsub.f32 %v372, %v449
        %v541 = vsub.f32 %v373, %v449
        %v542 = vsub.f32 %v374, %v453
        %v543 = vsub.f32 %v375, %v453
        %v544 = vsub.f32 %v376, %v453
        %v545 = vsub.f32 %v377, %v457
        %v546 = vsub.f32 %v378, %v457
        %v547 = vsub.f32 %v379, %v457
        %v548 = vsub.f32 %v380, %v461
        %v549 = vsub.f32 %v381, %v461
        %v550 = vsub.f32 %v382, %v461
        %v551 = vsub.f32 %v383, %v465
        %v552 = vsub.f32 %v384, %v465
        %v553 = vsub.f32 %v385, %v465
        %v554 = vsub.f32 %v386, %v469
        %v555 = vsub.f32 %v387, %v469
        %v556 = vsub.f32 %v388, %v469
        %v557 = vsub.f32 %v389, %v473
        %v558 = vsub.f32 %v390, %v473
        %v559 = vsub.f32 %v391, %v473
        %v560 = vsub.f32 %v392, %v477
        %v561 = vsub.f32 %v393, %v477
        %v562 = vsub.f32 %v394, %v477
        %v563 = vsub.f32 %v395, %v481
        %v564 = vsub.f32 %v396, %v481
        %v565 = vsub.f32 %v397, %v481
        %v566 = vsub.f32 %v398, %v485
        %v567 = vsub.f32 %v399, %v485
        %v568 = vsub.f32 %v400, %v485
        %v569 = vsub.f32 %v401, %v489
        %v570 = vsub.f32 %v402, %v489
        %v571 = vsub.f32 %v403, %v489
        %v572 = vsub.f32 %v404, %v493
        %v573 = vsub.f32 %v405, %v493
        %v574 = vsub.f32 %v406, %v493
        %v575 = vsub.f32 %v407, %v497
        %v576 = vsub.f32 %v408, %v497
        %v577 = vsub.f32 %v409, %v497
        %v578 = vsub.f32 %v410, %v501
        %v579 = vsub.f32 %v411, %v501
        %v580 = vsub.f32 %v412, %v501
        %v581 = vsub.f32 %v413, %v505
        %v582 = vsub.f32 %v414, %v505
        %v583 = vsub.f32 %v415, %v505
        %v584 = vsub.f32 %v416, %v509
        %v585 = vsub.f32 %v417, %v509
        %v586 = vsub.f32 %v418, %v509
        %v587 = vsub.f32 %v419, %v513
        %v588 = vsub.f32 %v420, %v513
        %v589 = vsub.f32 %v421, %v513
        %v590 = vsub.f32 %v422, %v517
        %v591 = vsub.f32 %v423, %v517
        %v592 = vsub.f32 %v424, %v517
        %v593 = vsub.f32 %v425, %v521
        %v594 = vsub.f32 %v426, %v521
        %v595 = vsub.f32 %v427, %v521
        %v596 = vsub.f32 %v428, %v525
        %v597 = vsub.f32 %v429, %v525
        %v598 = vsub.f32 %v430, %v525
        %v599 = vsub.f32 %v431, %v529
        %v600 = vsub.f32 %v432, %v529
        %v601 = vsub.f32 %v433, %v529
        %v602 = vmul.f32 %v530, 1.442695
        %v603 = vpow.pop %v602
        %v604 = vmul.f32 %v531, 1.442695
        %v605 = vpow.pop %v604
        %v606 = vmul.f32 %v532, 1.442695
        %v607 = vpow.pop %v606
        %v608 = vmul.f32 %v533, 1.442695
        %v609 = vpow.pop %v608
        %v610 = vmul.f32 %v534, 1.442695
        %v611 = vpow.pop %v610
        %v612 = vmul.f32 %v535, 1.442695
        %v613 = vpow.pop %v612
        %v614 = vmul.f32 %v536, 1.442695
        %v615 = vpow.pop %v614
        %v616 = vmul.f32 %v537, 1.442695
        %v617 = vpow.pop %v616
        %v618 = vmul.f32 %v538, 1.442695
        %v619 = vpow.pop %v618
        %v620 = vmul.f32 %v539, 1.442695
        %v621 = vpow.pop %v620
        %v622 = vmul.f32 %v540, 1.442695
        %v623 = vpow.pop %v622
        %v624 = vmul.f32 %v541, 1.442695
        %v625 = vpow.pop %v624
        %v626 = vmul.f32 %v542, 1.442695
        %v627 = vpow.pop %v626
        %v628 = vmul.f32 %v543, 1.442695
        %v629 = vpow.pop %v628
        %v630 = vmul.f32 %v544, 1.442695
        %v631 = vpow.pop %v630
        %v632 = vmul.f32 %v545, 1.442695
        %v633 = vpow.pop %v632
        %v634 = vmul.f32 %v546, 1.442695
        %v635 = vpow.pop %v634
        %v636 = vmul.f32 %v547, 1.442695
        %v637 = vpow.pop %v636
        %v638 = vmul.f32 %v548, 1.442695
        %v639 = vpow.pop %v638
        %v640 = vmul.f32 %v549, 1.442695
        %v641 = vpow.pop %v640
        %v642 = vmul.f32 %v550, 1.442695
        %v643 = vpow.pop %v642
        %v644 = vmul.f32 %v551, 1.442695
        %v645 = vpow.pop %v644
        %v646 = vmul.f32 %v552, 1.442695
        %v647 = vpow.pop %v646
        %v648 = vmul.f32 %v553, 1.442695
        %v649 = vpow.pop %v648
        %v650 = vmul.f32 %v554, 1.442695
        %v651 = vpow.pop %v650
        %v652 = vmul.f32 %v555, 1.442695
        %v653 = vpow.pop %v652
        %v654 = vmul.f32 %v556, 1.442695
        %v655 = vpow.pop %v654
        %v656 = vmul.f32 %v557, 1.442695
        %v657 = vpow.pop %v656
        %v658 = vmul.f32 %v558, 1.442695
        %v659 = vpow.pop %v658
        %v660 = vmul.f32 %v559, 1.442695
        %v661 = vpow.pop %v660
        %v662 = vmul.f32 %v560, 1.442695
        %v663 = vpow.pop %v662
        %v664 = vmul.f32 %v561, 1.442695
        %v665 = vpow.pop %v664
        %v666 = vmul.f32 %v562, 1.442695
        %v667 = vpow.pop %v666
        %v668 = vmul.f32 %v563, 1.442695
        %v669 = vpow.pop %v668
        %v670 = vmul.f32 %v564, 1.442695
        %v671 = vpow.pop %v670
        %v672 = vmul.f32 %v565, 1.442695
        %v673 = vpow.pop %v672
        %v674 = vmul.f32 %v566, 1.442695
        %v675 = vpow.pop %v674
        %v676 = vmul.f32 %v567, 1.442695
        %v677 = vpow.pop %v676
        %v678 = vmul.f32 %v568, 1.442695
        %v679 = vpow.pop %v678
        %v680 = vmul.f32 %v569, 1.442695
        %v681 = vpow.pop %v680
        %v682 = vmul.f32 %v570, 1.442695
        %v683 = vpow.pop %v682
        %v684 = vmul.f32 %v571, 1.442695
        %v685 = vpow.pop %v684
        %v686 = vmul.f32 %v572, 1.442695
        %v687 = vpow.pop %v686
        %v688 = vmul.f32 %v573, 1.442695
        %v689 = vpow.pop %v688
        %v690 = vmul.f32 %v574, 1.442695
        %v691 = vpow.pop %v690
        %v692 = vmul.f32 %v575, 1.442695
        %v693 = vpow.pop %v692
        %v694 = vmul.f32 %v576, 1.442695
        %v695 = vpow.pop %v694
        %v696 = vmul.f32 %v577, 1.442695
        %v697 = vpow.pop %v696
        %v698 = vmul.f32 %v578, 1.442695
        %v699 = vpow.pop %v698
        %v700 = vmul.f32 %v579, 1.442695
        %v701 = vpow.pop %v700
        %v702 = vmul.f32 %v580, 1.442695
        %v703 = vpow.pop %v702
        %v704 = vmul.f32 %v581, 1.442695
        %v705 = vpow.pop %v704
        %v706 = vmul.f32 %v582, 1.442695
        %v707 = vpow.pop %v706
        %v708 = vmul.f32 %v583, 1.442695
        %v709 = vpow.pop %v708
        %v710 = vmul.f32 %v584, 1.442695
        %v711 = vpow.pop %v710
        %v712 = vmul.f32 %v585, 1.442695
        %v713 = vpow.pop %v712
        %v714 = vmul.f32 %v586, 1.442695
        %v715 = vpow.pop %v714
        %v716 = vmul.f32 %v587, 1.442695
        %v717 = vpow.pop %v716
        %v718 = vmul.f32 %v588, 1.442695
        %v719 = vpow.pop %v718
        %v720 = vmul.f32 %v589, 1.442695
        %v721 = vpow.pop %v720
        %v722 = vmul.f32 %v590, 1.442695
        %v723 = vpow.pop %v722
        %v724 = vmul.f32 %v591, 1.442695
        %v725 = vpow.pop %v724
        %v726 = vmul.f32 %v592, 1.442695
        %v727 = vpow.pop %v726
        %v728 = vmul.f32 %v593, 1.442695
        %v729 = vpow.pop %v728
        %v730 = vmul.f32 %v594, 1.442695
        %v731 = vpow.pop %v730
        %v732 = vmul.f32 %v595, 1.442695
        %v733 = vpow.pop %v732
        %v734 = vmul.f32 %v596, 1.442695
        %v735 = vpow.pop %v734
        %v736 = vmul.f32 %v597, 1.442695
        %v737 = vpow.pop %v736
        %v738 = vmul.f32 %v598, 1.442695
        %v739 = vpow.pop %v738
        %v740 = vmul.f32 %v599, 1.442695
        %v741 = vpow.pop %v740
        %v742 = vmul.f32 %v600, 1.442695
        %v743 = vpow.pop %v742
        %v744 = vmul.f32 %v601, 1.442695
        %v745 = vpow.pop %v744
        %v746 = vadd.f32 %v603, %v605
        %v747 = vadd.f32 %v746, %v607
        %748 = vadd.xlane.f32.xlu0 %v747
        %v749 = vpop.xlane.xlu0 %748
        %v750 = vadd.f32 %v609, %v611
        %v751 = vadd.f32 %v750, %v613
        %752 = vadd.xlane.f32.xlu0 %v751
        %v753 = vpop.xlane.xlu0 %752
        %v754 = vadd.f32 %v615, %v617
        %v755 = vadd.f32 %v754, %v619
        %756 = vadd.xlane.f32.xlu0 %v755
        %v757 = vpop.xlane.xlu0 %756
        %v758 = vadd.f32 %v621, %v623
        %v759 = vadd.f32 %v758, %v625
        %760 = vadd.xlane.f32.xlu0 %v759
        %v761 = vpop.xlane.xlu0 %760
        %v762 = vadd.f32 %v627, %v629
        %v763 = vadd.f32 %v762, %v631
        %764 = vadd.xlane.f32.xlu0 %v763
        %v765 = vpop.xlane.xlu0 %764
        %v766 = vadd.f32 %v633, %v635
        %v767 = vadd.f32 %v766, %v637
        %768 = vadd.xlane.f32.xlu0 %v767
        %v769 = vpop.xlane.xlu0 %768
        %v770 = vadd.f32 %v639, %v641
        %v771 = vadd.f32 %v770, %v643
        %772 = vadd.xlane.f32.xlu0 %v771
        %v773 = vpop.xlane.xlu0 %772
        %v774 = vadd.f32 %v645, %v647
        %v775 = vadd.f32 %v774, %v649
        %776 = vadd.xlane.f32.xlu0 %v775
        %v777 = vpop.xlane.xlu0 %776
        %v778 = vadd.f32 %v651, %v653
        %v779 = vadd.f32 %v778, %v655
        %780 = vadd.xlane.f32.xlu0 %v779
        %v781 = vpop.xlane.xlu0 %780
        %v782 = vadd.f32 %v657, %v659
        %v783 = vadd.f32 %v782, %v661
        %784 = vadd.xlane.f32.xlu0 %v783
        %v785 = vpop.xlane.xlu0 %784
        %v786 = vadd.f32 %v663, %v665
        %v787 = vadd.f32 %v786, %v667
        %788 = vadd.xlane.f32.xlu0 %v787
        %v789 = vpop.xlane.xlu0 %788
        %v790 = vadd.f32 %v669, %v671
        %v791 = vadd.f32 %v790, %v673
        %792 = vadd.xlane.f32.xlu0 %v791
        %v793 = vpop.xlane.xlu0 %792
        %v794 = vadd.f32 %v675, %v677
        %v795 = vadd.f32 %v794, %v679
        %796 = vadd.xlane.f32.xlu0 %v795
        %v797 = vpop.xlane.xlu0 %796
        %v798 = vadd.f32 %v681, %v683
        %v799 = vadd.f32 %v798, %v685
        %800 = vadd.xlane.f32.xlu0 %v799
        %v801 = vpop.xlane.xlu0 %800
        %v802 = vadd.f32 %v687, %v689
        %v803 = vadd.f32 %v802, %v691
        %804 = vadd.xlane.f32.xlu0 %v803
        %v805 = vpop.xlane.xlu0 %804
        %v806 = vadd.f32 %v693, %v695
        %v807 = vadd.f32 %v806, %v697
        %808 = vadd.xlane.f32.xlu0 %v807
        %v809 = vpop.xlane.xlu0 %808
        %v810 = vadd.f32 %v699, %v701
        %v811 = vadd.f32 %v810, %v703
        %812 = vadd.xlane.f32.xlu0 %v811
        %v813 = vpop.xlane.xlu0 %812
        %v814 = vadd.f32 %v705, %v707
        %v815 = vadd.f32 %v814, %v709
        %816 = vadd.xlane.f32.xlu0 %v815
        %v817 = vpop.xlane.xlu0 %816
        %v818 = vadd.f32 %v711, %v713
        %v819 = vadd.f32 %v818, %v715
        %820 = vadd.xlane.f32.xlu0 %v819
        %v821 = vpop.xlane.xlu0 %820
        %v822 = vadd.f32 %v717, %v719
        %v823 = vadd.f32 %v822, %v721
        %824 = vadd.xlane.f32.xlu0 %v823
        %v825 = vpop.xlane.xlu0 %824
        %v826 = vadd.f32 %v723, %v725
        %v827 = vadd.f32 %v826, %v727
        %828 = vadd.xlane.f32.xlu0 %v827
        %v829 = vpop.xlane.xlu0 %828
        %v830 = vadd.f32 %v729, %v731
        %v831 = vadd.f32 %v830, %v733
        %832 = vadd.xlane.f32.xlu0 %v831
        %v833 = vpop.xlane.xlu0 %832
        %v834 = vadd.f32 %v735, %v737
        %v835 = vadd.f32 %v834, %v739
        %836 = vadd.xlane.f32.xlu0 %v835
        %v837 = vpop.xlane.xlu0 %836
        %v838 = vadd.f32 %v741, %v743
        %v839 = vadd.f32 %v838, %v745
        %840 = vadd.xlane.f32.xlu0 %v839
        %v841 = vpop.xlane.xlu0 %840
        %v842 = vpack.c.bf16 %v609, %v603
        %v843 = vpack.c.bf16 %v611, %v605
        %v844 = vpack.c.bf16 %v613, %v607
        %v845 = vpack.c.bf16 %v621, %v615
        %v846 = vpack.c.bf16 %v623, %v617
        %v847 = vpack.c.bf16 %v625, %v619
        %v848 = vpack.c.bf16 %v633, %v627
        %v849 = vpack.c.bf16 %v635, %v629
        %v850 = vpack.c.bf16 %v637, %v631
        %v851 = vpack.c.bf16 %v645, %v639
        %v852 = vpack.c.bf16 %v647, %v641
        %v853 = vpack.c.bf16 %v649, %v643
        %v854 = vpack.c.bf16 %v657, %v651
        %v855 = vpack.c.bf16 %v659, %v653
        %v856 = vpack.c.bf16 %v661, %v655
        %v857 = vpack.c.bf16 %v669, %v663
        %v858 = vpack.c.bf16 %v671, %v665
        %v859 = vpack.c.bf16 %v673, %v667
        %v860 = vpack.c.bf16 %v681, %v675
        %v861 = vpack.c.bf16 %v683, %v677
        %v862 = vpack.c.bf16 %v685, %v679
        %v863 = vpack.c.bf16 %v693, %v687
        %v864 = vpack.c.bf16 %v695, %v689
        %v865 = vpack.c.bf16 %v697, %v691
        %v866 = vpack.c.bf16 %v705, %v699
        %v867 = vpack.c.bf16 %v707, %v701
        %v868 = vpack.c.bf16 %v709, %v703
        %v869 = vpack.c.bf16 %v717, %v711
        %v870 = vpack.c.bf16 %v719, %v713
        %v871 = vpack.c.bf16 %v721, %v715
        %v872 = vpack.c.bf16 %v729, %v723
        %v873 = vpack.c.bf16 %v731, %v725
        %v874 = vpack.c.bf16 %v733, %v727
        %v875 = vpack.c.bf16 %v741, %v735
        %v876 = vpack.c.bf16 %v743, %v737
        %v877 = vpack.c.bf16 %v745, %v739
        %v878 = vld [vmem:[%s268] sm:$0xff]
        %v879 = vld [vmem:[%s268 + $0x8] sm:$0xff]
        %v880 = vld [vmem:[%s268 + $0x10] sm:$0xff]
        %v881 = vld [vmem:[%s268 + $0x18] sm:$0xff]
        %v882 = vld [vmem:[%s268 + $0x20] sm:$0xff]
        %v883 = vld [vmem:[%s268 + $0x28] sm:$0xff]
        %v884 = vld [vmem:[%s268 + $0x30] sm:$0xff]
        %v885 = vld [vmem:[%s268 + $0x38] sm:$0xff]
        %v886 = vld [vmem:[%s268 + $0x40] sm:$0xff]
        %v887 = vld [vmem:[%s268 + $0x48] sm:$0xff]
        %v888 = vld [vmem:[%s268 + $0x50] sm:$0xff]
        %v889 = vld [vmem:[%s268 + $0x58] sm:$0xff]
        %v890 = vld [vmem:[%s268 + $0x60] sm:$0xff]
        %v891 = vld [vmem:[%s268 + $0x68] sm:$0xff]
        %v892 = vld [vmem:[%s268 + $0x70] sm:$0xff]
        %v893 = vld [vmem:[%s268 + $0x78] sm:$0xff]
        %v894 = vld [vmem:[%s268 + $0x80] sm:$0xff]
        %v895 = vld [vmem:[%s268 + $0x88] sm:$0xff]
        %v896 = vld [vmem:[%s268 + $0x90] sm:$0xff]
        %v897 = vld [vmem:[%s268 + $0x98] sm:$0xff]
        %v898 = vld [vmem:[%s268 + $0xa0] sm:$0xff]
        %v899 = vld [vmem:[%s268 + $0xa8] sm:$0xff]
        %v900 = vld [vmem:[%s268 + $0xb0] sm:$0xff]
        %v901 = vld [vmem:[%s268 + $0xb8] sm:$0xff]
        %v902 = vld [vmem:[%s268 + $0xc0] sm:$0xff]
        %v903 = vld [vmem:[%s268 + $0xc8] sm:$0xff]
        %v904 = vld [vmem:[%s268 + $0xd0] sm:$0xff]
        %v905 = vld [vmem:[%s268 + $0xd8] sm:$0xff]
        %v906 = vld [vmem:[%s268 + $0xe0] sm:$0xff]
        %v907 = vld [vmem:[%s268 + $0xe8] sm:$0xff]
        %v908 = vld [vmem:[%s268 + $0xf0] sm:$0xff]
        %v909 = vld [vmem:[%s268 + $0xf8] sm:$0xff]
        %v910 = vld [vmem:[%s268 + $0x100] sm:$0xff]
        %v911 = vld [vmem:[%s268 + $0x108] sm:$0xff]
        %v912 = vld [vmem:[%s268 + $0x110] sm:$0xff]
        %v913 = vld [vmem:[%s268 + $0x118] sm:$0xff]
        %v914 = vld [vmem:[%s268 + $0x120] sm:$0xff]
        %v915 = vld [vmem:[%s268 + $0x128] sm:$0xff]
        %v916 = vld [vmem:[%s268 + $0x130] sm:$0xff]
        %v917 = vld [vmem:[%s268 + $0x138] sm:$0xff]
        %v918 = vld [vmem:[%s268 + $0x140] sm:$0xff]
        %v919 = vld [vmem:[%s268 + $0x148] sm:$0xff]
        %v920 = vld [vmem:[%s268 + $0x150] sm:$0xff]
        %v921 = vld [vmem:[%s268 + $0x158] sm:$0xff]
        %v922 = vld [vmem:[%s268 + $0x160] sm:$0xff]
        %v923 = vld [vmem:[%s268 + $0x168] sm:$0xff]
        %v924 = vld [vmem:[%s268 + $0x170] sm:$0xff]
        %v925 = vld [vmem:[%s268 + $0x178] sm:$0xff]
        %v926 = vpack.c.bf16 %v879, %v878
        %v927 = vpack.c.bf16 %v881, %v880
        %v928 = vpack.c.bf16 %v883, %v882
        %v929 = vpack.c.bf16 %v885, %v884
        %v930 = vpack.c.bf16 %v887, %v886
        %v931 = vpack.c.bf16 %v889, %v888
        %v932 = vpack.c.bf16 %v891, %v890
        %v933 = vpack.c.bf16 %v893, %v892
        %v934 = vpack.c.bf16 %v895, %v894
        %v935 = vpack.c.bf16 %v897, %v896
        %v936 = vpack.c.bf16 %v899, %v898
        %v937 = vpack.c.bf16 %v901, %v900
        %v938 = vpack.c.bf16 %v903, %v902
        %v939 = vpack.c.bf16 %v905, %v904
        %v940 = vpack.c.bf16 %v907, %v906
        %v941 = vpack.c.bf16 %v909, %v908
        %v942 = vpack.c.bf16 %v911, %v910
        %v943 = vpack.c.bf16 %v913, %v912
        %v944 = vpack.c.bf16 %v915, %v914
        %v945 = vpack.c.bf16 %v917, %v916
        %v946 = vpack.c.bf16 %v919, %v918
        %v947 = vpack.c.bf16 %v921, %v920
        %v948 = vpack.c.bf16 %v923, %v922
        %v949 = vpack.c.bf16 %v925, %v924
        %950 = vmatprep.subr.bf16.mxu0 0
        %951 = vmatpush1.bf16.msra.mxu0 %v933
        %952 = vmatprep.subr.bf16.mxu0 0
        %953 = vmatpush1.bf16.msra.mxu0 %v932
        %954 = vmatprep.subr.bf16.mxu0 0
        %955 = vmatpush1.bf16.msra.mxu0 %v931
        %956 = vmatprep.subr.bf16.mxu0 0
        %957 = vmatpush1.bf16.msra.mxu0 %v930
        %958 = vmatprep.subr.bf16.mxu0 0
        %959 = vmatpush1.bf16.msra.mxu0 %v929
        %960 = vmatprep.subr.bf16.mxu0 0
        %961 = vmatpush1.bf16.msra.mxu0 %v928
        %962 = vmatprep.subr.bf16.mxu0 0
        %963 = vmatpush1.bf16.msra.mxu0 %v927
        %964 = vmatprep.subr.bf16.mxu0 0
        %965 = vmatpush1.bf16.msra.mxu0 %v926
        %966 = vmatprep.subr.bf16.mxu0 0
        %967 = vmatpush2.bf16.msra.mxu0 %v941
        %968 = vmatprep.subr.bf16.mxu0 0
        %969 = vmatpush2.bf16.msra.mxu0 %v940
        %970 = vmatprep.subr.bf16.mxu0 0
        %971 = vmatpush2.bf16.msra.mxu0 %v939
        %972 = vmatprep.subr.bf16.mxu0 0
        %973 = vmatpush2.bf16.msra.mxu0 %v938
        %974 = vmatprep.subr.bf16.mxu0 0
        %975 = vmatpush2.bf16.msra.mxu0 %v937
        %976 = vmatprep.subr.bf16.mxu0 0
        %977 = vmatpush2.bf16.msra.mxu0 %v936
        %978 = vmatprep.subr.bf16.mxu0 0
        %979 = vmatpush2.bf16.msra.mxu0 %v935
        %980 = vmatprep.subr.bf16.mxu0 0
        %981 = vmatpush2.bf16.msra.mxu0 %v934
        %982 = vmatprep.mubr.bf16.mxu0 %v843
        %983 = vmatmul.mubr.bf16.gmra.mxu0 %v842
        %v984 = vpop.f32.mrf.mxu0
        %v985 = vadd.f32 0.0, %v984
        %v986 = vpop.f32.mrf.mxu0
        %v987 = vpop.f32.mrf.mxu0
        %v988 = vadd.f32 0.0, %v987
        %v989 = vpop.f32.mrf.mxu0
        %990 = vmatprep.mubr.bf16.mxu0 %v846
        %991 = vmatmul.mubr.bf16.gmra.mxu0 %v845
        %v992 = vpop.f32.mrf.mxu0
        %v993 = vadd.f32 0.0, %v992
        %v994 = vpop.f32.mrf.mxu0
        %v995 = vpop.f32.mrf.mxu0
        %v996 = vadd.f32 0.0, %v995
        %v997 = vpop.f32.mrf.mxu0
        %998 = vmatprep.mubr.bf16.mxu0 %v849
        %999 = vmatmul.mubr.bf16.gmra.mxu0 %v848
        %v1000 = vpop.f32.mrf.mxu0
        %v1001 = vadd.f32 0.0, %v1000
        %v1002 = vpop.f32.mrf.mxu0
        %v1003 = vpop.f32.mrf.mxu0
        %v1004 = vadd.f32 0.0, %v1003
        %v1005 = vpop.f32.mrf.mxu0
        %1006 = vmatprep.mubr.bf16.mxu0 %v852
        %1007 = vmatmul.mubr.bf16.gmra.mxu0 %v851
        %v1008 = vpop.f32.mrf.mxu0
        %v1009 = vadd.f32 0.0, %v1008
        %v1010 = vpop.f32.mrf.mxu0
        %v1011 = vpop.f32.mrf.mxu0
        %v1012 = vadd.f32 0.0, %v1011
        %v1013 = vpop.f32.mrf.mxu0
        %1014 = vmatprep.mubr.bf16.mxu0 %v855
        %1015 = vmatmul.mubr.bf16.gmra.mxu0 %v854
        %v1016 = vpop.f32.mrf.mxu0
        %v1017 = vadd.f32 0.0, %v1016
        %v1018 = vpop.f32.mrf.mxu0
        %v1019 = vpop.f32.mrf.mxu0
        %v1020 = vadd.f32 0.0, %v1019
        %v1021 = vpop.f32.mrf.mxu0
        %1022 = vmatprep.mubr.bf16.mxu0 %v858
        %1023 = vmatmul.mubr.bf16.gmra.mxu0 %v857
        %v1024 = vpop.f32.mrf.mxu0
        %v1025 = vadd.f32 0.0, %v1024
        %v1026 = vpop.f32.mrf.mxu0
        %v1027 = vpop.f32.mrf.mxu0
        %v1028 = vadd.f32 0.0, %v1027
        %v1029 = vpop.f32.mrf.mxu0
        %1030 = vmatprep.mubr.bf16.mxu0 %v861
        %1031 = vmatmul.mubr.bf16.gmra.mxu0 %v860
        %v1032 = vpop.f32.mrf.mxu0
        %v1033 = vadd.f32 0.0, %v1032
        %v1034 = vpop.f32.mrf.mxu0
        %v1035 = vpop.f32.mrf.mxu0
        %v1036 = vadd.f32 0.0, %v1035
        %v1037 = vpop.f32.mrf.mxu0
        %1038 = vmatprep.mubr.bf16.mxu0 %v864
        %1039 = vmatmul.mubr.bf16.gmra.mxu0 %v863
        %v1040 = vpop.f32.mrf.mxu0
        %v1041 = vadd.f32 0.0, %v1040
        %v1042 = vpop.f32.mrf.mxu0
        %v1043 = vpop.f32.mrf.mxu0
        %v1044 = vadd.f32 0.0, %v1043
        %v1045 = vpop.f32.mrf.mxu0
        %1046 = vmatprep.mubr.bf16.mxu0 %v867
        %1047 = vmatmul.mubr.bf16.gmra.mxu0 %v866
        %v1048 = vpop.f32.mrf.mxu0
        %v1049 = vadd.f32 0.0, %v1048
        %v1050 = vpop.f32.mrf.mxu0
        %v1051 = vpop.f32.mrf.mxu0
        %v1052 = vadd.f32 0.0, %v1051
        %v1053 = vpop.f32.mrf.mxu0
        %1054 = vmatprep.mubr.bf16.mxu0 %v870
        %1055 = vmatmul.mubr.bf16.gmra.mxu0 %v869
        %v1056 = vpop.f32.mrf.mxu0
        %v1057 = vadd.f32 0.0, %v1056
        %v1058 = vpop.f32.mrf.mxu0
        %v1059 = vpop.f32.mrf.mxu0
        %v1060 = vadd.f32 0.0, %v1059
        %v1061 = vpop.f32.mrf.mxu0
        %1062 = vmatprep.mubr.bf16.mxu0 %v873
        %1063 = vmatmul.mubr.bf16.gmra.mxu0 %v872
        %v1064 = vpop.f32.mrf.mxu0
        %v1065 = vadd.f32 0.0, %v1064
        %v1066 = vpop.f32.mrf.mxu0
        %v1067 = vpop.f32.mrf.mxu0
        %v1068 = vadd.f32 0.0, %v1067
        %v1069 = vpop.f32.mrf.mxu0
        %1070 = vmatprep.mubr.bf16.mxu0 %v876
        %1071 = vmatmul.mubr.bf16.gmra.mxu0 %v875
        %v1072 = vpop.f32.mrf.mxu0
        %v1073 = vadd.f32 0.0, %v1072
        %v1074 = vpop.f32.mrf.mxu0
        %v1075 = vpop.f32.mrf.mxu0
        %v1076 = vadd.f32 0.0, %v1075
        %v1077 = vpop.f32.mrf.mxu0
        %1078 = vdwg.mxu0
        %1079 = vmatprep.subr.bf16.mxu0 0
        %1080 = vmatpush1.bf16.msra.mxu0 %v949
        %1081 = vmatprep.subr.bf16.mxu0 0
        %1082 = vmatpush1.bf16.msra.mxu0 %v948
        %1083 = vmatprep.subr.bf16.mxu0 0
        %1084 = vmatpush1.bf16.msra.mxu0 %v947
        %1085 = vmatprep.subr.bf16.mxu0 0
        %1086 = vmatpush1.bf16.msra.mxu0 %v946
        %1087 = vmatprep.subr.bf16.mxu0 0
        %1088 = vmatpush1.bf16.msra.mxu0 %v945
        %1089 = vmatprep.subr.bf16.mxu0 0
        %1090 = vmatpush1.bf16.msra.mxu0 %v944
        %1091 = vmatprep.subr.bf16.mxu0 0
        %1092 = vmatpush1.bf16.msra.mxu0 %v943
        %1093 = vmatprep.subr.bf16.mxu0 0
        %1094 = vmatpush1.bf16.msra.mxu0 %v942
        %1095 = vmatprep.subr.bf16.mxu0 0
        %1096 = vmatpush2.bf16.msra.mxu0 0
        %1097 = vmatprep.subr.bf16.mxu0 0
        %1098 = vmatpush2.bf16.msra.mxu0 0
        %1099 = vmatprep.subr.bf16.mxu0 0
        %1100 = vmatpush2.bf16.msra.mxu0 0
        %1101 = vmatprep.subr.bf16.mxu0 0
        %1102 = vmatpush2.bf16.msra.mxu0 0
        %1103 = vmatprep.subr.bf16.mxu0 0
        %1104 = vmatpush2.bf16.msra.mxu0 0
        %1105 = vmatprep.subr.bf16.mxu0 0
        %1106 = vmatpush2.bf16.msra.mxu0 0
        %1107 = vmatprep.subr.bf16.mxu0 0
        %1108 = vmatpush2.bf16.msra.mxu0 0
        %1109 = vmatprep.subr.bf16.mxu0 0
        %1110 = vmatpush2.bf16.msra.mxu0 0
        %1111 = vmatprep.mubr.bf16.mxu0 0
        %1112 = vmatmul.mubr.bf16.gmra.mxu0 %v844
        %v1113 = vpop.f32.mrf.mxu0
        %v1114 = vadd.f32 %v985, %v1113
        %v1115 = vpop.f32.mrf.mxu0
        %v1116 = vpop.f32.mrf.mxu0
        %v1117 = vadd.f32 %v988, %v1116
        %v1118 = vpop.f32.mrf.mxu0
        %1119 = vmatprep.mubr.bf16.mxu0 0
        %1120 = vmatmul.mubr.bf16.gmra.mxu0 %v847
        %v1121 = vpop.f32.mrf.mxu0
        %v1122 = vadd.f32 %v993, %v1121
        %v1123 = vpop.f32.mrf.mxu0
        %v1124 = vpop.f32.mrf.mxu0
        %v1125 = vadd.f32 %v996, %v1124
        %v1126 = vpop.f32.mrf.mxu0
        %1127 = vmatprep.mubr.bf16.mxu0 0
        %1128 = vmatmul.mubr.bf16.gmra.mxu0 %v850
        %v1129 = vpop.f32.mrf.mxu0
        %v1130 = vadd.f32 %v1001, %v1129
        %v1131 = vpop.f32.mrf.mxu0
        %v1132 = vpop.f32.mrf.mxu0
        %v1133 = vadd.f32 %v1004, %v1132
        %v1134 = vpop.f32.mrf.mxu0
        %1135 = vmatprep.mubr.bf16.mxu0 0
        %1136 = vmatmul.mubr.bf16.gmra.mxu0 %v853
        %v1137 = vpop.f32.mrf.mxu0
        %v1138 = vadd.f32 %v1009, %v1137
        %v1139 = vpop.f32.mrf.mxu0
        %v1140 = vpop.f32.mrf.mxu0
        %v1141 = vadd.f32 %v1012, %v1140
        %v1142 = vpop.f32.mrf.mxu0
        %1143 = vmatprep.mubr.bf16.mxu0 0
        %1144 = vmatmul.mubr.bf16.gmra.mxu0 %v856
        %v1145 = vpop.f32.mrf.mxu0
        %v1146 = vadd.f32 %v1017, %v1145
        %v1147 = vpop.f32.mrf.mxu0
        %v1148 = vpop.f32.mrf.mxu0
        %v1149 = vadd.f32 %v1020, %v1148
        %v1150 = vpop.f32.mrf.mxu0
        %1151 = vmatprep.mubr.bf16.mxu0 0
        %1152 = vmatmul.mubr.bf16.gmra.mxu0 %v859
        %v1153 = vpop.f32.mrf.mxu0
        %v1154 = vadd.f32 %v1025, %v1153
        %v1155 = vpop.f32.mrf.mxu0
        %v1156 = vpop.f32.mrf.mxu0
        %v1157 = vadd.f32 %v1028, %v1156
        %v1158 = vpop.f32.mrf.mxu0
        %1159 = vmatprep.mubr.bf16.mxu0 0
        %1160 = vmatmul.mubr.bf16.gmra.mxu0 %v862
        %v1161 = vpop.f32.mrf.mxu0
        %v1162 = vadd.f32 %v1033, %v1161
        %v1163 = vpop.f32.mrf.mxu0
        %v1164 = vpop.f32.mrf.mxu0
        %v1165 = vadd.f32 %v1036, %v1164
        %v1166 = vpop.f32.mrf.mxu0
        %1167 = vmatprep.mubr.bf16.mxu0 0
        %1168 = vmatmul.mubr.bf16.gmra.mxu0 %v865
        %v1169 = vpop.f32.mrf.mxu0
        %v1170 = vadd.f32 %v1041, %v1169
        %v1171 = vpop.f32.mrf.mxu0
        %v1172 = vpop.f32.mrf.mxu0
        %v1173 = vadd.f32 %v1044, %v1172
        %v1174 = vpop.f32.mrf.mxu0
        %1175 = vmatprep.mubr.bf16.mxu0 0
        %1176 = vmatmul.mubr.bf16.gmra.mxu0 %v868
        %v1177 = vpop.f32.mrf.mxu0
        %v1178 = vadd.f32 %v1049, %v1177
        %v1179 = vpop.f32.mrf.mxu0
        %v1180 = vpop.f32.mrf.mxu0
        %v1181 = vadd.f32 %v1052, %v1180
        %v1182 = vpop.f32.mrf.mxu0
        %1183 = vmatprep.mubr.bf16.mxu0 0
        %1184 = vmatmul.mubr.bf16.gmra.mxu0 %v871
        %v1185 = vpop.f32.mrf.mxu0
        %v1186 = vadd.f32 %v1057, %v1185
        %v1187 = vpop.f32.mrf.mxu0
        %v1188 = vpop.f32.mrf.mxu0
        %v1189 = vadd.f32 %v1060, %v1188
        %v1190 = vpop.f32.mrf.mxu0
        %1191 = vmatprep.mubr.bf16.mxu0 0
        %1192 = vmatmul.mubr.bf16.gmra.mxu0 %v874
        %v1193 = vpop.f32.mrf.mxu0
        %v1194 = vadd.f32 %v1065, %v1193
        %v1195 = vpop.f32.mrf.mxu0
        %v1196 = vpop.f32.mrf.mxu0
        %v1197 = vadd.f32 %v1068, %v1196
        %v1198 = vpop.f32.mrf.mxu0
        %1199 = vmatprep.mubr.bf16.mxu0 0
        %1200 = vmatmul.mubr.bf16.gmra.mxu0 %v877
        %v1201 = vpop.f32.mrf.mxu0
        %v1202 = vadd.f32 %v1073, %v1201
        %v1203 = vpop.f32.mrf.mxu0
        %v1204 = vpop.f32.mrf.mxu0
        %v1205 = vadd.f32 %v1076, %v1204
        %v1206 = vpop.f32.mrf.mxu0
        %1207 = vdwg.mxu0
        %v1208 = vrcp.pop %v749
        %v1209 = vrcp.pop %v753
        %v1210 = vrcp.pop %v757
        %v1211 = vrcp.pop %v761
        %v1212 = vrcp.pop %v765
        %v1213 = vrcp.pop %v769
        %v1214 = vrcp.pop %v773
        %v1215 = vrcp.pop %v777
        %v1216 = vrcp.pop %v781
        %v1217 = vrcp.pop %v785
        %v1218 = vrcp.pop %v789
        %v1219 = vrcp.pop %v793
        %v1220 = vrcp.pop %v797
        %v1221 = vrcp.pop %v801
        %v1222 = vrcp.pop %v805
        %v1223 = vrcp.pop %v809
        %v1224 = vrcp.pop %v813
        %v1225 = vrcp.pop %v817
        %v1226 = vrcp.pop %v821
        %v1227 = vrcp.pop %v825
        %v1228 = vrcp.pop %v829
        %v1229 = vrcp.pop %v833
        %v1230 = vrcp.pop %v837
        %v1231 = vrcp.pop %v841
        %v1232 = vmul.f32 %v1114, %v1208
        %v1233 = vmul.f32 %v1117, %v1209
        %v1234 = vmul.f32 %v1122, %v1210
        %v1235 = vmul.f32 %v1125, %v1211
        %v1236 = vmul.f32 %v1130, %v1212
        %v1237 = vmul.f32 %v1133, %v1213
        %v1238 = vmul.f32 %v1138, %v1214
        %v1239 = vmul.f32 %v1141, %v1215
        %v1240 = vmul.f32 %v1146, %v1216
        %v1241 = vmul.f32 %v1149, %v1217
        %v1242 = vmul.f32 %v1154, %v1218
        %v1243 = vmul.f32 %v1157, %v1219
        %v1244 = vmul.f32 %v1162, %v1220
        %v1245 = vmul.f32 %v1165, %v1221
        %v1246 = vmul.f32 %v1170, %v1222
        %v1247 = vmul.f32 %v1173, %v1223
        %v1248 = vmul.f32 %v1178, %v1224
        %v1249 = vmul.f32 %v1181, %v1225
        %v1250 = vmul.f32 %v1186, %v1226
        %v1251 = vmul.f32 %v1189, %v1227
        %v1252 = vmul.f32 %v1194, %v1228
        %v1253 = vmul.f32 %v1197, %v1229
        %v1254 = vmul.f32 %v1202, %v1230
        %v1255 = vmul.f32 %v1205, %v1231
        %vm1256 = vcmask 523264
        %1257 = vst.msk [vmem:[%s260] sm:$0xff] %vm1256, %v1232
        %1258 = vst.msk [vmem:[%s260 + $0x8] sm:$0xff] %vm1256, %v1233
        %1259 = vst.msk [vmem:[%s260 + $0x10] sm:$0xff] %vm1256, %v1234
        %1260 = vst.msk [vmem:[%s260 + $0x18] sm:$0xff] %vm1256, %v1235
        %1261 = vst.msk [vmem:[%s260 + $0x20] sm:$0xff] %vm1256, %v1236
        %1262 = vst.msk [vmem:[%s260 + $0x28] sm:$0xff] %vm1256, %v1237
        %1263 = vst.msk [vmem:[%s260 + $0x30] sm:$0xff] %vm1256, %v1238
        %1264 = vst.msk [vmem:[%s260 + $0x38] sm:$0xff] %vm1256, %v1239
        %1265 = vst.msk [vmem:[%s260 + $0x40] sm:$0xff] %vm1256, %v1240
        %1266 = vst.msk [vmem:[%s260 + $0x48] sm:$0xff] %vm1256, %v1241
        %1267 = vst.msk [vmem:[%s260 + $0x50] sm:$0xff] %vm1256, %v1242
        %1268 = vst.msk [vmem:[%s260 + $0x58] sm:$0xff] %vm1256, %v1243
        %1269 = vst.msk [vmem:[%s260 + $0x60] sm:$0xff] %vm1256, %v1244
        %1270 = vst.msk [vmem:[%s260 + $0x68] sm:$0xff] %vm1256, %v1245
        %1271 = vst.msk [vmem:[%s260 + $0x70] sm:$0xff] %vm1256, %v1246
        %1272 = vst.msk [vmem:[%s260 + $0x78] sm:$0xff] %vm1256, %v1247
        %1273 = vst.msk [vmem:[%s260 + $0x80] sm:$0xff] %vm1256, %v1248
        %1274 = vst.msk [vmem:[%s260 + $0x88] sm:$0xff] %vm1256, %v1249
        %1275 = vst.msk [vmem:[%s260 + $0x90] sm:$0xff] %vm1256, %v1250
        %1276 = vst.msk [vmem:[%s260 + $0x98] sm:$0xff] %vm1256, %v1251
        %1277 = vst.msk [vmem:[%s260 + $0xa0] sm:$0xff] %vm1256, %v1252
        %1278 = vst.msk [vmem:[%s260 + $0xa8] sm:$0xff] %vm1256, %v1253
        %1279 = vst.msk [vmem:[%s260 + $0xb0] sm:$0xff] %vm1256, %v1254
        %1280 = vst.msk [vmem:[%s260 + $0xb8] sm:$0xff] %vm1256, %v1255
        %s1281 = scalar_lea.vmem %s233, 576 [#allocation4]
        %v1282 = vld [vmem:[%s1281] sm:$0xff]
        %v1283 = vld [vmem:[%s1281 + $0x8] sm:$0xff]
        %v1284 = vld [vmem:[%s1281 + $0x10] sm:$0xff]
        %v1285 = vld [vmem:[%s1281 + $0x18] sm:$0xff]
        %v1286 = vld [vmem:[%s1281 + $0x20] sm:$0xff]
        %v1287 = vld [vmem:[%s1281 + $0x28] sm:$0xff]
        %v1288 = vld [vmem:[%s1281 + $0x30] sm:$0xff]
        %v1289 = vld [vmem:[%s1281 + $0x38] sm:$0xff]
        %v1290 = vld [vmem:[%s1281 + $0x40] sm:$0xff]
        %v1291 = vld [vmem:[%s1281 + $0x48] sm:$0xff]
        %v1292 = vld [vmem:[%s1281 + $0x50] sm:$0xff]
        %v1293 = vld [vmem:[%s1281 + $0x58] sm:$0xff]
        %v1294 = vld [vmem:[%s1281 + $0x60] sm:$0xff]
        %v1295 = vld [vmem:[%s1281 + $0x68] sm:$0xff]
        %v1296 = vld [vmem:[%s1281 + $0x70] sm:$0xff]
        %v1297 = vld [vmem:[%s1281 + $0x78] sm:$0xff]
        %v1298 = vld [vmem:[%s1281 + $0x80] sm:$0xff]
        %v1299 = vld [vmem:[%s1281 + $0x88] sm:$0xff]
        %v1300 = vld [vmem:[%s1281 + $0x90] sm:$0xff]
        %v1301 = vld [vmem:[%s1281 + $0x98] sm:$0xff]
        %v1302 = vld [vmem:[%s1281 + $0xa0] sm:$0xff]
        %v1303 = vld [vmem:[%s1281 + $0xa8] sm:$0xff]
        %v1304 = vld [vmem:[%s1281 + $0xb0] sm:$0xff]
        %v1305 = vld [vmem:[%s1281 + $0xb8] sm:$0xff]
        %v1306 = vld [vmem:[%s1281 + $0xc0] sm:$0xff]
        %v1307 = vld [vmem:[%s1281 + $0xc8] sm:$0xff]
        %v1308 = vld [vmem:[%s1281 + $0xd0] sm:$0xff]
        %v1309 = vld [vmem:[%s1281 + $0xd8] sm:$0xff]
        %v1310 = vld [vmem:[%s1281 + $0xe0] sm:$0xff]
        %v1311 = vld [vmem:[%s1281 + $0xe8] sm:$0xff]
        %v1312 = vld [vmem:[%s1281 + $0xf0] sm:$0xff]
        %v1313 = vld [vmem:[%s1281 + $0xf8] sm:$0xff]
        %v1314 = vld [vmem:[%s1281 + $0x100] sm:$0xff]
        %v1315 = vld [vmem:[%s1281 + $0x108] sm:$0xff]
        %v1316 = vld [vmem:[%s1281 + $0x110] sm:$0xff]
        %v1317 = vld [vmem:[%s1281 + $0x118] sm:$0xff]
        %v1318 = vld [vmem:[%s1281 + $0x120] sm:$0xff]
        %v1319 = vld [vmem:[%s1281 + $0x128] sm:$0xff]
        %v1320 = vld [vmem:[%s1281 + $0x130] sm:$0xff]
        %v1321 = vld [vmem:[%s1281 + $0x138] sm:$0xff]
        %v1322 = vld [vmem:[%s1281 + $0x140] sm:$0xff]
        %v1323 = vld [vmem:[%s1281 + $0x148] sm:$0xff]
        %v1324 = vld [vmem:[%s1281 + $0x150] sm:$0xff]
        %v1325 = vld [vmem:[%s1281 + $0x158] sm:$0xff]
        %v1326 = vld [vmem:[%s1281 + $0x160] sm:$0xff]
        %v1327 = vld [vmem:[%s1281 + $0x168] sm:$0xff]
        %v1328 = vld [vmem:[%s1281 + $0x170] sm:$0xff]
        %v1329 = vld [vmem:[%s1281 + $0x178] sm:$0xff]
        %v1330 = vld [vmem:[%s1281 + $0x180] sm:$0xff]
        %v1331 = vld [vmem:[%s1281 + $0x188] sm:$0xff]
        %v1332 = vld [vmem:[%s1281 + $0x190] sm:$0xff]
        %v1333 = vld [vmem:[%s1281 + $0x198] sm:$0xff]
        %v1334 = vld [vmem:[%s1281 + $0x1a0] sm:$0xff]
        %v1335 = vld [vmem:[%s1281 + $0x1a8] sm:$0xff]
        %v1336 = vld [vmem:[%s1281 + $0x1b0] sm:$0xff]
        %v1337 = vld [vmem:[%s1281 + $0x1b8] sm:$0xff]
        %v1338 = vld [vmem:[%s1281 + $0x1c0] sm:$0xff]
        %v1339 = vld [vmem:[%s1281 + $0x1c8] sm:$0xff]
        %v1340 = vld [vmem:[%s1281 + $0x1d0] sm:$0xff]
        %v1341 = vld [vmem:[%s1281 + $0x1d8] sm:$0xff]
        %v1342 = vld [vmem:[%s1281 + $0x1e0] sm:$0xff]
        %v1343 = vld [vmem:[%s1281 + $0x1e8] sm:$0xff]
        %v1344 = vld [vmem:[%s1281 + $0x1f0] sm:$0xff]
        %v1345 = vld [vmem:[%s1281 + $0x1f8] sm:$0xff]
        %v1346 = vld [vmem:[%s1281 + $0x200] sm:$0xff]
        %v1347 = vld [vmem:[%s1281 + $0x208] sm:$0xff]
        %v1348 = vld [vmem:[%s1281 + $0x210] sm:$0xff]
        %v1349 = vld [vmem:[%s1281 + $0x218] sm:$0xff]
        %v1350 = vld [vmem:[%s1281 + $0x220] sm:$0xff]
        %v1351 = vld [vmem:[%s1281 + $0x228] sm:$0xff]
        %v1352 = vld [vmem:[%s1281 + $0x230] sm:$0xff]
        %v1353 = vld [vmem:[%s1281 + $0x238] sm:$0xff]
        %v1354 = vadd.f32 %v1282, %v278
        %v1355 = vadd.f32 %v1283, %v282
        %v1356 = vadd.f32 %v1284, %v286
        %v1357 = vadd.f32 %v1285, %v278
        %v1358 = vadd.f32 %v1286, %v282
        %v1359 = vadd.f32 %v1287, %v286
        %v1360 = vadd.f32 %v1288, %v278
        %v1361 = vadd.f32 %v1289, %v282
        %v1362 = vadd.f32 %v1290, %v286
        %v1363 = vadd.f32 %v1291, %v278
        %v1364 = vadd.f32 %v1292, %v282
        %v1365 = vadd.f32 %v1293, %v286
        %v1366 = vadd.f32 %v1294, %v278
        %v1367 = vadd.f32 %v1295, %v282
        %v1368 = vadd.f32 %v1296, %v286
        %v1369 = vadd.f32 %v1297, %v278
        %v1370 = vadd.f32 %v1298, %v282
        %v1371 = vadd.f32 %v1299, %v286
        %v1372 = vadd.f32 %v1300, %v278
        %v1373 = vadd.f32 %v1301, %v282
        %v1374 = vadd.f32 %v1302, %v286
        %v1375 = vadd.f32 %v1303, %v278
        %v1376 = vadd.f32 %v1304, %v282
        %v1377 = vadd.f32 %v1305, %v286
        %v1378 = vadd.f32 %v1306, %v278
        %v1379 = vadd.f32 %v1307, %v282
        %v1380 = vadd.f32 %v1308, %v286
        %v1381 = vadd.f32 %v1309, %v278
        %v1382 = vadd.f32 %v1310, %v282
        %v1383 = vadd.f32 %v1311, %v286
        %v1384 = vadd.f32 %v1312, %v278
        %v1385 = vadd.f32 %v1313, %v282
        %v1386 = vadd.f32 %v1314, %v286
        %v1387 = vadd.f32 %v1315, %v278
        %v1388 = vadd.f32 %v1316, %v282
        %v1389 = vadd.f32 %v1317, %v286
        %v1390 = vadd.f32 %v1318, %v278
        %v1391 = vadd.f32 %v1319, %v282
        %v1392 = vadd.f32 %v1320, %v286
        %v1393 = vadd.f32 %v1321, %v278
        %v1394 = vadd.f32 %v1322, %v282
        %v1395 = vadd.f32 %v1323, %v286
        %v1396 = vadd.f32 %v1324, %v278
        %v1397 = vadd.f32 %v1325, %v282
        %v1398 = vadd.f32 %v1326, %v286
        %v1399 = vadd.f32 %v1327, %v278
        %v1400 = vadd.f32 %v1328, %v282
        %v1401 = vadd.f32 %v1329, %v286
        %v1402 = vadd.f32 %v1330, %v278
        %v1403 = vadd.f32 %v1331, %v282
        %v1404 = vadd.f32 %v1332, %v286
        %v1405 = vadd.f32 %v1333, %v278
        %v1406 = vadd.f32 %v1334, %v282
        %v1407 = vadd.f32 %v1335, %v286
        %v1408 = vadd.f32 %v1336, %v278
        %v1409 = vadd.f32 %v1337, %v282
        %v1410 = vadd.f32 %v1338, %v286
        %v1411 = vadd.f32 %v1339, %v278
        %v1412 = vadd.f32 %v1340, %v282
        %v1413 = vadd.f32 %v1341, %v286
        %v1414 = vadd.f32 %v1342, %v278
        %v1415 = vadd.f32 %v1343, %v282
        %v1416 = vadd.f32 %v1344, %v286
        %v1417 = vadd.f32 %v1345, %v278
        %v1418 = vadd.f32 %v1346, %v282
        %v1419 = vadd.f32 %v1347, %v286
        %v1420 = vadd.f32 %v1348, %v278
        %v1421 = vadd.f32 %v1349, %v282
        %v1422 = vadd.f32 %v1350, %v286
        %v1423 = vadd.f32 %v1351, %v278
        %v1424 = vadd.f32 %v1352, %v282
        %v1425 = vadd.f32 %v1353, %v286
        %v1426 = vmax.f32 %v1354, %v1355
        %v1427 = vmax.f32 %v1426, %v1356
        %1428 = vmax.xlane.f32.xlu0 %v1427
        %v1429 = vpop.xlane.xlu0 %1428
        %v1430 = vmax.f32 %v1357, %v1358
        %v1431 = vmax.f32 %v1430, %v1359
        %1432 = vmax.xlane.f32.xlu0 %v1431
        %v1433 = vpop.xlane.xlu0 %1432
        %v1434 = vmax.f32 %v1360, %v1361
        %v1435 = vmax.f32 %v1434, %v1362
        %1436 = vmax.xlane.f32.xlu0 %v1435
        %v1437 = vpop.xlane.xlu0 %1436
        %v1438 = vmax.f32 %v1363, %v1364
        %v1439 = vmax.f32 %v1438, %v1365
        %1440 = vmax.xlane.f32.xlu0 %v1439
        %v1441 = vpop.xlane.xlu0 %1440
        %v1442 = vmax.f32 %v1366, %v1367
        %v1443 = vmax.f32 %v1442, %v1368
        %1444 = vmax.xlane.f32.xlu0 %v1443
        %v1445 = vpop.xlane.xlu0 %1444
        %v1446 = vmax.f32 %v1369, %v1370
        %v1447 = vmax.f32 %v1446, %v1371
        %1448 = vmax.xlane.f32.xlu0 %v1447
        %v1449 = vpop.xlane.xlu0 %1448
        %v1450 = vmax.f32 %v1372, %v1373
        %v1451 = vmax.f32 %v1450, %v1374
        %1452 = vmax.xlane.f32.xlu0 %v1451
        %v1453 = vpop.xlane.xlu0 %1452
        %v1454 = vmax.f32 %v1375, %v1376
        %v1455 = vmax.f32 %v1454, %v1377
        %1456 = vmax.xlane.f32.xlu0 %v1455
        %v1457 = vpop.xlane.xlu0 %1456
        %v1458 = vmax.f32 %v1378, %v1379
        %v1459 = vmax.f32 %v1458, %v1380
        %1460 = vmax.xlane.f32.xlu0 %v1459
        %v1461 = vpop.xlane.xlu0 %1460
        %v1462 = vmax.f32 %v1381, %v1382
        %v1463 = vmax.f32 %v1462, %v1383
        %1464 = vmax.xlane.f32.xlu0 %v1463
        %v1465 = vpop.xlane.xlu0 %1464
        %v1466 = vmax.f32 %v1384, %v1385
        %v1467 = vmax.f32 %v1466, %v1386
        %1468 = vmax.xlane.f32.xlu0 %v1467
        %v1469 = vpop.xlane.xlu0 %1468
        %v1470 = vmax.f32 %v1387, %v1388
        %v1471 = vmax.f32 %v1470, %v1389
        %1472 = vmax.xlane.f32.xlu0 %v1471
        %v1473 = vpop.xlane.xlu0 %1472
        %v1474 = vmax.f32 %v1390, %v1391
        %v1475 = vmax.f32 %v1474, %v1392
        %1476 = vmax.xlane.f32.xlu0 %v1475
        %v1477 = vpop.xlane.xlu0 %1476
        %v1478 = vmax.f32 %v1393, %v1394
        %v1479 = vmax.f32 %v1478, %v1395
        %1480 = vmax.xlane.f32.xlu0 %v1479
        %v1481 = vpop.xlane.xlu0 %1480
        %v1482 = vmax.f32 %v1396, %v1397
        %v1483 = vmax.f32 %v1482, %v1398
        %1484 = vmax.xlane.f32.xlu0 %v1483
        %v1485 = vpop.xlane.xlu0 %1484
        %v1486 = vmax.f32 %v1399, %v1400
        %v1487 = vmax.f32 %v1486, %v1401
        %1488 = vmax.xlane.f32.xlu0 %v1487
        %v1489 = vpop.xlane.xlu0 %1488
        %v1490 = vmax.f32 %v1402, %v1403
        %v1491 = vmax.f32 %v1490, %v1404
        %1492 = vmax.xlane.f32.xlu0 %v1491
        %v1493 = vpop.xlane.xlu0 %1492
        %v1494 = vmax.f32 %v1405, %v1406
        %v1495 = vmax.f32 %v1494, %v1407
        %1496 = vmax.xlane.f32.xlu0 %v1495
        %v1497 = vpop.xlane.xlu0 %1496
        %v1498 = vmax.f32 %v1408, %v1409
        %v1499 = vmax.f32 %v1498, %v1410
        %1500 = vmax.xlane.f32.xlu0 %v1499
        %v1501 = vpop.xlane.xlu0 %1500
        %v1502 = vmax.f32 %v1411, %v1412
        %v1503 = vmax.f32 %v1502, %v1413
        %1504 = vmax.xlane.f32.xlu0 %v1503
        %v1505 = vpop.xlane.xlu0 %1504
        %v1506 = vmax.f32 %v1414, %v1415
        %v1507 = vmax.f32 %v1506, %v1416
        %1508 = vmax.xlane.f32.xlu0 %v1507
        %v1509 = vpop.xlane.xlu0 %1508
        %v1510 = vmax.f32 %v1417, %v1418
        %v1511 = vmax.f32 %v1510, %v1419
        %1512 = vmax.xlane.f32.xlu0 %v1511
        %v1513 = vpop.xlane.xlu0 %1512
        %v1514 = vmax.f32 %v1420, %v1421
        %v1515 = vmax.f32 %v1514, %v1422
        %1516 = vmax.xlane.f32.xlu0 %v1515
        %v1517 = vpop.xlane.xlu0 %1516
        %v1518 = vmax.f32 %v1423, %v1424
        %v1519 = vmax.f32 %v1518, %v1425
        %1520 = vmax.xlane.f32.xlu0 %v1519
        %v1521 = vpop.xlane.xlu0 %1520
        %v1522 = vsub.f32 %v1354, %v1429
        %v1523 = vsub.f32 %v1355, %v1429
        %v1524 = vsub.f32 %v1356, %v1429
        %v1525 = vsub.f32 %v1357, %v1433
        %v1526 = vsub.f32 %v1358, %v1433
        %v1527 = vsub.f32 %v1359, %v1433
        %v1528 = vsub.f32 %v1360, %v1437
        %v1529 = vsub.f32 %v1361, %v1437
        %v1530 = vsub.f32 %v1362, %v1437
        %v1531 = vsub.f32 %v1363, %v1441
        %v1532 = vsub.f32 %v1364, %v1441
        %v1533 = vsub.f32 %v1365, %v1441
        %v1534 = vsub.f32 %v1366, %v1445
        %v1535 = vsub.f32 %v1367, %v1445
        %v1536 = vsub.f32 %v1368, %v1445
        %v1537 = vsub.f32 %v1369, %v1449
        %v1538 = vsub.f32 %v1370, %v1449
        %v1539 = vsub.f32 %v1371, %v1449
        %v1540 = vsub.f32 %v1372, %v1453
        %v1541 = vsub.f32 %v1373, %v1453
        %v1542 = vsub.f32 %v1374, %v1453
        %v1543 = vsub.f32 %v1375, %v1457
        %v1544 = vsub.f32 %v1376, %v1457
        %v1545 = vsub.f32 %v1377, %v1457
        %v1546 = vsub.f32 %v1378, %v1461
        %v1547 = vsub.f32 %v1379, %v1461
        %v1548 = vsub.f32 %v1380, %v1461
        %v1549 = vsub.f32 %v1381, %v1465
        %v1550 = vsub.f32 %v1382, %v1465
        %v1551 = vsub.f32 %v1383, %v1465
        %v1552 = vsub.f32 %v1384, %v1469
        %v1553 = vsub.f32 %v1385, %v1469
        %v1554 = vsub.f32 %v1386, %v1469
        %v1555 = vsub.f32 %v1387, %v1473
        %v1556 = vsub.f32 %v1388, %v1473
        %v1557 = vsub.f32 %v1389, %v1473
        %v1558 = vsub.f32 %v1390, %v1477
        %v1559 = vsub.f32 %v1391, %v1477
        %v1560 = vsub.f32 %v1392, %v1477
        %v1561 = vsub.f32 %v1393, %v1481
        %v1562 = vsub.f32 %v1394, %v1481
        %v1563 = vsub.f32 %v1395, %v1481
        %v1564 = vsub.f32 %v1396, %v1485
        %v1565 = vsub.f32 %v1397, %v1485
        %v1566 = vsub.f32 %v1398, %v1485
        %v1567 = vsub.f32 %v1399, %v1489
        %v1568 = vsub.f32 %v1400, %v1489
        %v1569 = vsub.f32 %v1401, %v1489
        %v1570 = vsub.f32 %v1402, %v1493
        %v1571 = vsub.f32 %v1403, %v1493
        %v1572 = vsub.f32 %v1404, %v1493
        %v1573 = vsub.f32 %v1405, %v1497
        %v1574 = vsub.f32 %v1406, %v1497
        %v1575 = vsub.f32 %v1407, %v1497
        %v1576 = vsub.f32 %v1408, %v1501
        %v1577 = vsub.f32 %v1409, %v1501
        %v1578 = vsub.f32 %v1410, %v1501
        %v1579 = vsub.f32 %v1411, %v1505
        %v1580 = vsub.f32 %v1412, %v1505
        %v1581 = vsub.f32 %v1413, %v1505
        %v1582 = vsub.f32 %v1414, %v1509
        %v1583 = vsub.f32 %v1415, %v1509
        %v1584 = vsub.f32 %v1416, %v1509
        %v1585 = vsub.f32 %v1417, %v1513
        %v1586 = vsub.f32 %v1418, %v1513
        %v1587 = vsub.f32 %v1419, %v1513
        %v1588 = vsub.f32 %v1420, %v1517
        %v1589 = vsub.f32 %v1421, %v1517
        %v1590 = vsub.f32 %v1422, %v1517
        %v1591 = vsub.f32 %v1423, %v1521
        %v1592 = vsub.f32 %v1424, %v1521
        %v1593 = vsub.f32 %v1425, %v1521
        %v1594 = vmul.f32 %v1522, 1.442695
        %v1595 = vpow.pop %v1594
        %v1596 = vmul.f32 %v1523, 1.442695
        %v1597 = vpow.pop %v1596
        %v1598 = vmul.f32 %v1524, 1.442695
        %v1599 = vpow.pop %v1598
        %v1600 = vmul.f32 %v1525, 1.442695
        %v1601 = vpow.pop %v1600
        %v1602 = vmul.f32 %v1526, 1.442695
        %v1603 = vpow.pop %v1602
        %v1604 = vmul.f32 %v1527, 1.442695
        %v1605 = vpow.pop %v1604
        %v1606 = vmul.f32 %v1528, 1.442695
        %v1607 = vpow.pop %v1606
        %v1608 = vmul.f32 %v1529, 1.442695
        %v1609 = vpow.pop %v1608
        %v1610 = vmul.f32 %v1530, 1.442695
        %v1611 = vpow.pop %v1610
        %v1612 = vmul.f32 %v1531, 1.442695
        %v1613 = vpow.pop %v1612
        %v1614 = vmul.f32 %v1532, 1.442695
        %v1615 = vpow.pop %v1614
        %v1616 = vmul.f32 %v1533, 1.442695
        %v1617 = vpow.pop %v1616
        %v1618 = vmul.f32 %v1534, 1.442695
        %v1619 = vpow.pop %v1618
        %v1620 = vmul.f32 %v1535, 1.442695
        %v1621 = vpow.pop %v1620
        %v1622 = vmul.f32 %v1536, 1.442695
        %v1623 = vpow.pop %v1622
        %v1624 = vmul.f32 %v1537, 1.442695
        %v1625 = vpow.pop %v1624
        %v1626 = vmul.f32 %v1538, 1.442695
        %v1627 = vpow.pop %v1626
        %v1628 = vmul.f32 %v1539, 1.442695
        %v1629 = vpow.pop %v1628
        %v1630 = vmul.f32 %v1540, 1.442695
        %v1631 = vpow.pop %v1630
        %v1632 = vmul.f32 %v1541, 1.442695
        %v1633 = vpow.pop %v1632
        %v1634 = vmul.f32 %v1542, 1.442695
        %v1635 = vpow.pop %v1634
        %v1636 = vmul.f32 %v1543, 1.442695
        %v1637 = vpow.pop %v1636
        %v1638 = vmul.f32 %v1544, 1.442695
        %v1639 = vpow.pop %v1638
        %v1640 = vmul.f32 %v1545, 1.442695
        %v1641 = vpow.pop %v1640
        %v1642 = vmul.f32 %v1546, 1.442695
        %v1643 = vpow.pop %v1642
        %v1644 = vmul.f32 %v1547, 1.442695
        %v1645 = vpow.pop %v1644
        %v1646 = vmul.f32 %v1548, 1.442695
        %v1647 = vpow.pop %v1646
        %v1648 = vmul.f32 %v1549, 1.442695
        %v1649 = vpow.pop %v1648
        %v1650 = vmul.f32 %v1550, 1.442695
        %v1651 = vpow.pop %v1650
        %v1652 = vmul.f32 %v1551, 1.442695
        %v1653 = vpow.pop %v1652
        %v1654 = vmul.f32 %v1552, 1.442695
        %v1655 = vpow.pop %v1654
        %v1656 = vmul.f32 %v1553, 1.442695
        %v1657 = vpow.pop %v1656
        %v1658 = vmul.f32 %v1554, 1.442695
        %v1659 = vpow.pop %v1658
        %v1660 = vmul.f32 %v1555, 1.442695
        %v1661 = vpow.pop %v1660
        %v1662 = vmul.f32 %v1556, 1.442695
        %v1663 = vpow.pop %v1662
        %v1664 = vmul.f32 %v1557, 1.442695
        %v1665 = vpow.pop %v1664
        %v1666 = vmul.f32 %v1558, 1.442695
        %v1667 = vpow.pop %v1666
        %v1668 = vmul.f32 %v1559, 1.442695
        %v1669 = vpow.pop %v1668
        %v1670 = vmul.f32 %v1560, 1.442695
        %v1671 = vpow.pop %v1670
        %v1672 = vmul.f32 %v1561, 1.442695
        %v1673 = vpow.pop %v1672
        %v1674 = vmul.f32 %v1562, 1.442695
        %v1675 = vpow.pop %v1674
        %v1676 = vmul.f32 %v1563, 1.442695
        %v1677 = vpow.pop %v1676
        %v1678 = vmul.f32 %v1564, 1.442695
        %v1679 = vpow.pop %v1678
        %v1680 = vmul.f32 %v1565, 1.442695
        %v1681 = vpow.pop %v1680
        %v1682 = vmul.f32 %v1566, 1.442695
        %v1683 = vpow.pop %v1682
        %v1684 = vmul.f32 %v1567, 1.442695
        %v1685 = vpow.pop %v1684
        %v1686 = vmul.f32 %v1568, 1.442695
        %v1687 = vpow.pop %v1686
        %v1688 = vmul.f32 %v1569, 1.442695
        %v1689 = vpow.pop %v1688
        %v1690 = vmul.f32 %v1570, 1.442695
        %v1691 = vpow.pop %v1690
        %v1692 = vmul.f32 %v1571, 1.442695
        %v1693 = vpow.pop %v1692
        %v1694 = vmul.f32 %v1572, 1.442695
        %v1695 = vpow.pop %v1694
        %v1696 = vmul.f32 %v1573, 1.442695
        %v1697 = vpow.pop %v1696
        %v1698 = vmul.f32 %v1574, 1.442695
        %v1699 = vpow.pop %v1698
        %v1700 = vmul.f32 %v1575, 1.442695
        %v1701 = vpow.pop %v1700
        %v1702 = vmul.f32 %v1576, 1.442695
        %v1703 = vpow.pop %v1702
        %v1704 = vmul.f32 %v1577, 1.442695
        %v1705 = vpow.pop %v1704
        %v1706 = vmul.f32 %v1578, 1.442695
        %v1707 = vpow.pop %v1706
        %v1708 = vmul.f32 %v1579, 1.442695
        %v1709 = vpow.pop %v1708
        %v1710 = vmul.f32 %v1580, 1.442695
        %v1711 = vpow.pop %v1710
        %v1712 = vmul.f32 %v1581, 1.442695
        %v1713 = vpow.pop %v1712
        %v1714 = vmul.f32 %v1582, 1.442695
        %v1715 = vpow.pop %v1714
        %v1716 = vmul.f32 %v1583, 1.442695
        %v1717 = vpow.pop %v1716
        %v1718 = vmul.f32 %v1584, 1.442695
        %v1719 = vpow.pop %v1718
        %v1720 = vmul.f32 %v1585, 1.442695
        %v1721 = vpow.pop %v1720
        %v1722 = vmul.f32 %v1586, 1.442695
        %v1723 = vpow.pop %v1722
        %v1724 = vmul.f32 %v1587, 1.442695
        %v1725 = vpow.pop %v1724
        %v1726 = vmul.f32 %v1588, 1.442695
        %v1727 = vpow.pop %v1726
        %v1728 = vmul.f32 %v1589, 1.442695
        %v1729 = vpow.pop %v1728
        %v1730 = vmul.f32 %v1590, 1.442695
        %v1731 = vpow.pop %v1730
        %v1732 = vmul.f32 %v1591, 1.442695
        %v1733 = vpow.pop %v1732
        %v1734 = vmul.f32 %v1592, 1.442695
        %v1735 = vpow.pop %v1734
        %v1736 = vmul.f32 %v1593, 1.442695
        %v1737 = vpow.pop %v1736
        %v1738 = vadd.f32 %v1595, %v1597
        %v1739 = vadd.f32 %v1738, %v1599
        %1740 = vadd.xlane.f32.xlu0 %v1739
        %v1741 = vpop.xlane.xlu0 %1740
        %v1742 = vadd.f32 %v1601, %v1603
        %v1743 = vadd.f32 %v1742, %v1605
        %1744 = vadd.xlane.f32.xlu0 %v1743
        %v1745 = vpop.xlane.xlu0 %1744
        %v1746 = vadd.f32 %v1607, %v1609
        %v1747 = vadd.f32 %v1746, %v1611
        %1748 = vadd.xlane.f32.xlu0 %v1747
        %v1749 = vpop.xlane.xlu0 %1748
        %v1750 = vadd.f32 %v1613, %v1615
        %v1751 = vadd.f32 %v1750, %v1617
        %1752 = vadd.xlane.f32.xlu0 %v1751
        %v1753 = vpop.xlane.xlu0 %1752
        %v1754 = vadd.f32 %v1619, %v1621
        %v1755 = vadd.f32 %v1754, %v1623
        %1756 = vadd.xlane.f32.xlu0 %v1755
        %v1757 = vpop.xlane.xlu0 %1756
        %v1758 = vadd.f32 %v1625, %v1627
        %v1759 = vadd.f32 %v1758, %v1629
        %1760 = vadd.xlane.f32.xlu0 %v1759
        %v1761 = vpop.xlane.xlu0 %1760
        %v1762 = vadd.f32 %v1631, %v1633
        %v1763 = vadd.f32 %v1762, %v1635
        %1764 = vadd.xlane.f32.xlu0 %v1763
        %v1765 = vpop.xlane.xlu0 %1764
        %v1766 = vadd.f32 %v1637, %v1639
        %v1767 = vadd.f32 %v1766, %v1641
        %1768 = vadd.xlane.f32.xlu0 %v1767
        %v1769 = vpop.xlane.xlu0 %1768
        %v1770 = vadd.f32 %v1643, %v1645
        %v1771 = vadd.f32 %v1770, %v1647
        %1772 = vadd.xlane.f32.xlu0 %v1771
        %v1773 = vpop.xlane.xlu0 %1772
        %v1774 = vadd.f32 %v1649, %v1651
        %v1775 = vadd.f32 %v1774, %v1653
        %1776 = vadd.xlane.f32.xlu0 %v1775
        %v1777 = vpop.xlane.xlu0 %1776
        %v1778 = vadd.f32 %v1655, %v1657
        %v1779 = vadd.f32 %v1778, %v1659
        %1780 = vadd.xlane.f32.xlu0 %v1779
        %v1781 = vpop.xlane.xlu0 %1780
        %v1782 = vadd.f32 %v1661, %v1663
        %v1783 = vadd.f32 %v1782, %v1665
        %1784 = vadd.xlane.f32.xlu0 %v1783
        %v1785 = vpop.xlane.xlu0 %1784
        %v1786 = vadd.f32 %v1667, %v1669
        %v1787 = vadd.f32 %v1786, %v1671
        %1788 = vadd.xlane.f32.xlu0 %v1787
        %v1789 = vpop.xlane.xlu0 %1788
        %v1790 = vadd.f32 %v1673, %v1675
        %v1791 = vadd.f32 %v1790, %v1677
        %1792 = vadd.xlane.f32.xlu0 %v1791
        %v1793 = vpop.xlane.xlu0 %1792
        %v1794 = vadd.f32 %v1679, %v1681
        %v1795 = vadd.f32 %v1794, %v1683
        %1796 = vadd.xlane.f32.xlu0 %v1795
        %v1797 = vpop.xlane.xlu0 %1796
        %v1798 = vadd.f32 %v1685, %v1687
        %v1799 = vadd.f32 %v1798, %v1689
        %1800 = vadd.xlane.f32.xlu0 %v1799
        %v1801 = vpop.xlane.xlu0 %1800
        %v1802 = vadd.f32 %v1691, %v1693
        %v1803 = vadd.f32 %v1802, %v1695
        %1804 = vadd.xlane.f32.xlu0 %v1803
        %v1805 = vpop.xlane.xlu0 %1804
        %v1806 = vadd.f32 %v1697, %v1699
        %v1807 = vadd.f32 %v1806, %v1701
        %1808 = vadd.xlane.f32.xlu0 %v1807
        %v1809 = vpop.xlane.xlu0 %1808
        %v1810 = vadd.f32 %v1703, %v1705
        %v1811 = vadd.f32 %v1810, %v1707
        %1812 = vadd.xlane.f32.xlu0 %v1811
        %v1813 = vpop.xlane.xlu0 %1812
        %v1814 = vadd.f32 %v1709, %v1711
        %v1815 = vadd.f32 %v1814, %v1713
        %1816 = vadd.xlane.f32.xlu0 %v1815
        %v1817 = vpop.xlane.xlu0 %1816
        %v1818 = vadd.f32 %v1715, %v1717
        %v1819 = vadd.f32 %v1818, %v1719
        %1820 = vadd.xlane.f32.xlu0 %v1819
        %v1821 = vpop.xlane.xlu0 %1820
        %v1822 = vadd.f32 %v1721, %v1723
        %v1823 = vadd.f32 %v1822, %v1725
        %1824 = vadd.xlane.f32.xlu0 %v1823
        %v1825 = vpop.xlane.xlu0 %1824
        %v1826 = vadd.f32 %v1727, %v1729
        %v1827 = vadd.f32 %v1826, %v1731
        %1828 = vadd.xlane.f32.xlu0 %v1827
        %v1829 = vpop.xlane.xlu0 %1828
        %v1830 = vadd.f32 %v1733, %v1735
        %v1831 = vadd.f32 %v1830, %v1737
        %1832 = vadd.xlane.f32.xlu0 %v1831
        %v1833 = vpop.xlane.xlu0 %1832
        %v1834 = vpack.c.bf16 %v1601, %v1595
        %v1835 = vpack.c.bf16 %v1603, %v1597
        %v1836 = vpack.c.bf16 %v1605, %v1599
        %v1837 = vpack.c.bf16 %v1613, %v1607
        %v1838 = vpack.c.bf16 %v1615, %v1609
        %v1839 = vpack.c.bf16 %v1617, %v1611
        %v1840 = vpack.c.bf16 %v1625, %v1619
        %v1841 = vpack.c.bf16 %v1627, %v1621
        %v1842 = vpack.c.bf16 %v1629, %v1623
        %v1843 = vpack.c.bf16 %v1637, %v1631
        %v1844 = vpack.c.bf16 %v1639, %v1633
        %v1845 = vpack.c.bf16 %v1641, %v1635
        %v1846 = vpack.c.bf16 %v1649, %v1643
        %v1847 = vpack.c.bf16 %v1651, %v1645
        %v1848 = vpack.c.bf16 %v1653, %v1647
        %v1849 = vpack.c.bf16 %v1661, %v1655
        %v1850 = vpack.c.bf16 %v1663, %v1657
        %v1851 = vpack.c.bf16 %v1665, %v1659
        %v1852 = vpack.c.bf16 %v1673, %v1667
        %v1853 = vpack.c.bf16 %v1675, %v1669
        %v1854 = vpack.c.bf16 %v1677, %v1671
        %v1855 = vpack.c.bf16 %v1685, %v1679
        %v1856 = vpack.c.bf16 %v1687, %v1681
        %v1857 = vpack.c.bf16 %v1689, %v1683
        %v1858 = vpack.c.bf16 %v1697, %v1691
        %v1859 = vpack.c.bf16 %v1699, %v1693
        %v1860 = vpack.c.bf16 %v1701, %v1695
        %v1861 = vpack.c.bf16 %v1709, %v1703
        %v1862 = vpack.c.bf16 %v1711, %v1705
        %v1863 = vpack.c.bf16 %v1713, %v1707
        %v1864 = vpack.c.bf16 %v1721, %v1715
        %v1865 = vpack.c.bf16 %v1723, %v1717
        %v1866 = vpack.c.bf16 %v1725, %v1719
        %v1867 = vpack.c.bf16 %v1733, %v1727
        %v1868 = vpack.c.bf16 %v1735, %v1729
        %v1869 = vpack.c.bf16 %v1737, %v1731
        %s1870 = scalar_lea.vmem %s268, 384
        %v1871 = vld [vmem:[%s1870] sm:$0xff]
        %v1872 = vld [vmem:[%s1870 + $0x8] sm:$0xff]
        %v1873 = vld [vmem:[%s1870 + $0x10] sm:$0xff]
        %v1874 = vld [vmem:[%s1870 + $0x18] sm:$0xff]
        %v1875 = vld [vmem:[%s1870 + $0x20] sm:$0xff]
        %v1876 = vld [vmem:[%s1870 + $0x28] sm:$0xff]
        %v1877 = vld [vmem:[%s1870 + $0x30] sm:$0xff]
        %v1878 = vld [vmem:[%s1870 + $0x38] sm:$0xff]
        %v1879 = vld [vmem:[%s1870 + $0x40] sm:$0xff]
        %v1880 = vld [vmem:[%s1870 + $0x48] sm:$0xff]
        %v1881 = vld [vmem:[%s1870 + $0x50] sm:$0xff]
        %v1882 = vld [vmem:[%s1870 + $0x58] sm:$0xff]
        %v1883 = vld [vmem:[%s1870 + $0x60] sm:$0xff]
        %v1884 = vld [vmem:[%s1870 + $0x68] sm:$0xff]
        %v1885 = vld [vmem:[%s1870 + $0x70] sm:$0xff]
        %v1886 = vld [vmem:[%s1870 + $0x78] sm:$0xff]
        %v1887 = vld [vmem:[%s1870 + $0x80] sm:$0xff]
        %v1888 = vld [vmem:[%s1870 + $0x88] sm:$0xff]
        %v1889 = vld [vmem:[%s1870 + $0x90] sm:$0xff]
        %v1890 = vld [vmem:[%s1870 + $0x98] sm:$0xff]
        %v1891 = vld [vmem:[%s1870 + $0xa0] sm:$0xff]
        %v1892 = vld [vmem:[%s1870 + $0xa8] sm:$0xff]
        %v1893 = vld [vmem:[%s1870 + $0xb0] sm:$0xff]
        %v1894 = vld [vmem:[%s1870 + $0xb8] sm:$0xff]
        %v1895 = vld [vmem:[%s1870 + $0xc0] sm:$0xff]
        %v1896 = vld [vmem:[%s1870 + $0xc8] sm:$0xff]
        %v1897 = vld [vmem:[%s1870 + $0xd0] sm:$0xff]
        %v1898 = vld [vmem:[%s1870 + $0xd8] sm:$0xff]
        %v1899 = vld [vmem:[%s1870 + $0xe0] sm:$0xff]
        %v1900 = vld [vmem:[%s1870 + $0xe8] sm:$0xff]
        %v1901 = vld [vmem:[%s1870 + $0xf0] sm:$0xff]
        %v1902 = vld [vmem:[%s1870 + $0xf8] sm:$0xff]
        %v1903 = vld [vmem:[%s1870 + $0x100] sm:$0xff]
        %v1904 = vld [vmem:[%s1870 + $0x108] sm:$0xff]
        %v1905 = vld [vmem:[%s1870 + $0x110] sm:$0xff]
        %v1906 = vld [vmem:[%s1870 + $0x118] sm:$0xff]
        %v1907 = vld [vmem:[%s1870 + $0x120] sm:$0xff]
        %v1908 = vld [vmem:[%s1870 + $0x128] sm:$0xff]
        %v1909 = vld [vmem:[%s1870 + $0x130] sm:$0xff]
        %v1910 = vld [vmem:[%s1870 + $0x138] sm:$0xff]
        %v1911 = vld [vmem:[%s1870 + $0x140] sm:$0xff]
        %v1912 = vld [vmem:[%s1870 + $0x148] sm:$0xff]
        %v1913 = vld [vmem:[%s1870 + $0x150] sm:$0xff]
        %v1914 = vld [vmem:[%s1870 + $0x158] sm:$0xff]
        %v1915 = vld [vmem:[%s1870 + $0x160] sm:$0xff]
        %v1916 = vld [vmem:[%s1870 + $0x168] sm:$0xff]
        %v1917 = vld [vmem:[%s1870 + $0x170] sm:$0xff]
        %v1918 = vld [vmem:[%s1870 + $0x178] sm:$0xff]
        %v1919 = vpack.c.bf16 %v1872, %v1871
        %v1920 = vpack.c.bf16 %v1874, %v1873
        %v1921 = vpack.c.bf16 %v1876, %v1875
        %v1922 = vpack.c.bf16 %v1878, %v1877
        %v1923 = vpack.c.bf16 %v1880, %v1879
        %v1924 = vpack.c.bf16 %v1882, %v1881
        %v1925 = vpack.c.bf16 %v1884, %v1883
        %v1926 = vpack.c.bf16 %v1886, %v1885
        %v1927 = vpack.c.bf16 %v1888, %v1887
        %v1928 = vpack.c.bf16 %v1890, %v1889
        %v1929 = vpack.c.bf16 %v1892, %v1891
        %v1930 = vpack.c.bf16 %v1894, %v1893
        %v1931 = vpack.c.bf16 %v1896, %v1895
        %v1932 = vpack.c.bf16 %v1898, %v1897
        %v1933 = vpack.c.bf16 %v1900, %v1899
        %v1934 = vpack.c.bf16 %v1902, %v1901
        %v1935 = vpack.c.bf16 %v1904, %v1903
        %v1936 = vpack.c.bf16 %v1906, %v1905
        %v1937 = vpack.c.bf16 %v1908, %v1907
        %v1938 = vpack.c.bf16 %v1910, %v1909
        %v1939 = vpack.c.bf16 %v1912, %v1911
        %v1940 = vpack.c.bf16 %v1914, %v1913
        %v1941 = vpack.c.bf16 %v1916, %v1915
        %v1942 = vpack.c.bf16 %v1918, %v1917
        %1943 = vmatprep.subr.bf16.mxu0 0
        %1944 = vmatpush1.bf16.msra.mxu0 %v1926
        %1945 = vmatprep.subr.bf16.mxu0 0
        %1946 = vmatpush1.bf16.msra.mxu0 %v1925
        %1947 = vmatprep.subr.bf16.mxu0 0
        %1948 = vmatpush1.bf16.msra.mxu0 %v1924
        %1949 = vmatprep.subr.bf16.mxu0 0
        %1950 = vmatpush1.bf16.msra.mxu0 %v1923
        %1951 = vmatprep.subr.bf16.mxu0 0
        %1952 = vmatpush1.bf16.msra.mxu0 %v1922
        %1953 = vmatprep.subr.bf16.mxu0 0
        %1954 = vmatpush1.bf16.msra.mxu0 %v1921
        %1955 = vmatprep.subr.bf16.mxu0 0
        %1956 = vmatpush1.bf16.msra.mxu0 %v1920
        %1957 = vmatprep.subr.bf16.mxu0 0
        %1958 = vmatpush1.bf16.msra.mxu0 %v1919
        %1959 = vmatprep.subr.bf16.mxu0 0
        %1960 = vmatpush2.bf16.msra.mxu0 %v1934
        %1961 = vmatprep.subr.bf16.mxu0 0
        %1962 = vmatpush2.bf16.msra.mxu0 %v1933
        %1963 = vmatprep.subr.bf16.mxu0 0
        %1964 = vmatpush2.bf16.msra.mxu0 %v1932
        %1965 = vmatprep.subr.bf16.mxu0 0
        %1966 = vmatpush2.bf16.msra.mxu0 %v1931
        %1967 = vmatprep.subr.bf16.mxu0 0
        %1968 = vmatpush2.bf16.msra.mxu0 %v1930
        %1969 = vmatprep.subr.bf16.mxu0 0
        %1970 = vmatpush2.bf16.msra.mxu0 %v1929
        %1971 = vmatprep.subr.bf16.mxu0 0
        %1972 = vmatpush2.bf16.msra.mxu0 %v1928
        %1973 = vmatprep.subr.bf16.mxu0 0
        %1974 = vmatpush2.bf16.msra.mxu0 %v1927
        %1975 = vmatprep.mubr.bf16.mxu0 %v1835
        %1976 = vmatmul.mubr.bf16.gmra.mxu0 %v1834
        %v1977 = vpop.f32.mrf.mxu0
        %v1978 = vadd.f32 0.0, %v1977
        %v1979 = vpop.f32.mrf.mxu0
        %v1980 = vpop.f32.mrf.mxu0
        %v1981 = vadd.f32 0.0, %v1980
        %v1982 = vpop.f32.mrf.mxu0
        %1983 = vmatprep.mubr.bf16.mxu0 %v1838
        %1984 = vmatmul.mubr.bf16.gmra.mxu0 %v1837
        %v1985 = vpop.f32.mrf.mxu0
        %v1986 = vadd.f32 0.0, %v1985
        %v1987 = vpop.f32.mrf.mxu0
        %v1988 = vpop.f32.mrf.mxu0
        %v1989 = vadd.f32 0.0, %v1988
        %v1990 = vpop.f32.mrf.mxu0
        %1991 = vmatprep.mubr.bf16.mxu0 %v1841
        %1992 = vmatmul.mubr.bf16.gmra.mxu0 %v1840
        %v1993 = vpop.f32.mrf.mxu0
        %v1994 = vadd.f32 0.0, %v1993
        %v1995 = vpop.f32.mrf.mxu0
        %v1996 = vpop.f32.mrf.mxu0
        %v1997 = vadd.f32 0.0, %v1996
        %v1998 = vpop.f32.mrf.mxu0
        %1999 = vmatprep.mubr.bf16.mxu0 %v1844
        %2000 = vmatmul.mubr.bf16.gmra.mxu0 %v1843
        %v2001 = vpop.f32.mrf.mxu0
        %v2002 = vadd.f32 0.0, %v2001
        %v2003 = vpop.f32.mrf.mxu0
        %v2004 = vpop.f32.mrf.mxu0
        %v2005 = vadd.f32 0.0, %v2004
        %v2006 = vpop.f32.mrf.mxu0
        %2007 = vmatprep.mubr.bf16.mxu0 %v1847
        %2008 = vmatmul.mubr.bf16.gmra.mxu0 %v1846
        %v2009 = vpop.f32.mrf.mxu0
        %v2010 = vadd.f32 0.0, %v2009
        %v2011 = vpop.f32.mrf.mxu0
        %v2012 = vpop.f32.mrf.mxu0
        %v2013 = vadd.f32 0.0, %v2012
        %v2014 = vpop.f32.mrf.mxu0
        %2015 = vmatprep.mubr.bf16.mxu0 %v1850
        %2016 = vmatmul.mubr.bf16.gmra.mxu0 %v1849
        %v2017 = vpop.f32.mrf.mxu0
        %v2018 = vadd.f32 0.0, %v2017
        %v2019 = vpop.f32.mrf.mxu0
        %v2020 = vpop.f32.mrf.mxu0
        %v2021 = vadd.f32 0.0, %v2020
        %v2022 = vpop.f32.mrf.mxu0
        %2023 = vmatprep.mubr.bf16.mxu0 %v1853
        %2024 = vmatmul.mubr.bf16.gmra.mxu0 %v1852
        %v2025 = vpop.f32.mrf.mxu0
        %v2026 = vadd.f32 0.0, %v2025
        %v2027 = vpop.f32.mrf.mxu0
        %v2028 = vpop.f32.mrf.mxu0
        %v2029 = vadd.f32 0.0, %v2028
        %v2030 = vpop.f32.mrf.mxu0
        %2031 = vmatprep.mubr.bf16.mxu0 %v1856
        %2032 = vmatmul.mubr.bf16.gmra.mxu0 %v1855
        %v2033 = vpop.f32.mrf.mxu0
        %v2034 = vadd.f32 0.0, %v2033
        %v2035 = vpop.f32.mrf.mxu0
        %v2036 = vpop.f32.mrf.mxu0
        %v2037 = vadd.f32 0.0, %v2036
        %v2038 = vpop.f32.mrf.mxu0
        %2039 = vmatprep.mubr.bf16.mxu0 %v1859
        %2040 = vmatmul.mubr.bf16.gmra.mxu0 %v1858
        %v2041 = vpop.f32.mrf.mxu0
        %v2042 = vadd.f32 0.0, %v2041
        %v2043 = vpop.f32.mrf.mxu0
        %v2044 = vpop.f32.mrf.mxu0
        %v2045 = vadd.f32 0.0, %v2044
        %v2046 = vpop.f32.mrf.mxu0
        %2047 = vmatprep.mubr.bf16.mxu0 %v1862
        %2048 = vmatmul.mubr.bf16.gmra.mxu0 %v1861
        %v2049 = vpop.f32.mrf.mxu0
        %v2050 = vadd.f32 0.0, %v2049
        %v2051 = vpop.f32.mrf.mxu0
        %v2052 = vpop.f32.mrf.mxu0
        %v2053 = vadd.f32 0.0, %v2052
        %v2054 = vpop.f32.mrf.mxu0
        %2055 = vmatprep.mubr.bf16.mxu0 %v1865
        %2056 = vmatmul.mubr.bf16.gmra.mxu0 %v1864
        %v2057 = vpop.f32.mrf.mxu0
        %v2058 = vadd.f32 0.0, %v2057
        %v2059 = vpop.f32.mrf.mxu0
        %v2060 = vpop.f32.mrf.mxu0
        %v2061 = vadd.f32 0.0, %v2060
        %v2062 = vpop.f32.mrf.mxu0
        %2063 = vmatprep.mubr.bf16.mxu0 %v1868
        %2064 = vmatmul.mubr.bf16.gmra.mxu0 %v1867
        %v2065 = vpop.f32.mrf.mxu0
        %v2066 = vadd.f32 0.0, %v2065
        %v2067 = vpop.f32.mrf.mxu0
        %v2068 = vpop.f32.mrf.mxu0
        %v2069 = vadd.f32 0.0, %v2068
        %v2070 = vpop.f32.mrf.mxu0
        %2071 = vdwg.mxu0
        %2072 = vmatprep.subr.bf16.mxu0 0
        %2073 = vmatpush1.bf16.msra.mxu0 %v1942
        %2074 = vmatprep.subr.bf16.mxu0 0
        %2075 = vmatpush1.bf16.msra.mxu0 %v1941
        %2076 = vmatprep.subr.bf16.mxu0 0
        %2077 = vmatpush1.bf16.msra.mxu0 %v1940
        %2078 = vmatprep.subr.bf16.mxu0 0
        %2079 = vmatpush1.bf16.msra.mxu0 %v1939
        %2080 = vmatprep.subr.bf16.mxu0 0
        %2081 = vmatpush1.bf16.msra.mxu0 %v1938
        %2082 = vmatprep.subr.bf16.mxu0 0
        %2083 = vmatpush1.bf16.msra.mxu0 %v1937
        %2084 = vmatprep.subr.bf16.mxu0 0
        %2085 = vmatpush1.bf16.msra.mxu0 %v1936
        %2086 = vmatprep.subr.bf16.mxu0 0
        %2087 = vmatpush1.bf16.msra.mxu0 %v1935
        %2088 = vmatprep.subr.bf16.mxu0 0
        %2089 = vmatpush2.bf16.msra.mxu0 0
        %2090 = vmatprep.subr.bf16.mxu0 0
        %2091 = vmatpush2.bf16.msra.mxu0 0
        %2092 = vmatprep.subr.bf16.mxu0 0
        %2093 = vmatpush2.bf16.msra.mxu0 0
        %2094 = vmatprep.subr.bf16.mxu0 0
        %2095 = vmatpush2.bf16.msra.mxu0 0
        %2096 = vmatprep.subr.bf16.mxu0 0
        %2097 = vmatpush2.bf16.msra.mxu0 0
        %2098 = vmatprep.subr.bf16.mxu0 0
        %2099 = vmatpush2.bf16.msra.mxu0 0
        %2100 = vmatprep.subr.bf16.mxu0 0
        %2101 = vmatpush2.bf16.msra.mxu0 0
        %2102 = vmatprep.subr.bf16.mxu0 0
        %2103 = vmatpush2.bf16.msra.mxu0 0
        %2104 = vmatprep.mubr.bf16.mxu0 0
        %2105 = vmatmul.mubr.bf16.gmra.mxu0 %v1836
        %v2106 = vpop.f32.mrf.mxu0
        %v2107 = vadd.f32 %v1978, %v2106
        %v2108 = vpop.f32.mrf.mxu0
        %v2109 = vpop.f32.mrf.mxu0
        %v2110 = vadd.f32 %v1981, %v2109
        %v2111 = vpop.f32.mrf.mxu0
        %2112 = vmatprep.mubr.bf16.mxu0 0
        %2113 = vmatmul.mubr.bf16.gmra.mxu0 %v1839
        %v2114 = vpop.f32.mrf.mxu0
        %v2115 = vadd.f32 %v1986, %v2114
        %v2116 = vpop.f32.mrf.mxu0
        %v2117 = vpop.f32.mrf.mxu0
        %v2118 = vadd.f32 %v1989, %v2117
        %v2119 = vpop.f32.mrf.mxu0
        %2120 = vmatprep.mubr.bf16.mxu0 0
        %2121 = vmatmul.mubr.bf16.gmra.mxu0 %v1842
        %v2122 = vpop.f32.mrf.mxu0
        %v2123 = vadd.f32 %v1994, %v2122
        %v2124 = vpop.f32.mrf.mxu0
        %v2125 = vpop.f32.mrf.mxu0
        %v2126 = vadd.f32 %v1997, %v2125
        %v2127 = vpop.f32.mrf.mxu0
        %2128 = vmatprep.mubr.bf16.mxu0 0
        %2129 = vmatmul.mubr.bf16.gmra.mxu0 %v1845
        %v2130 = vpop.f32.mrf.mxu0
        %v2131 = vadd.f32 %v2002, %v2130
        %v2132 = vpop.f32.mrf.mxu0
        %v2133 = vpop.f32.mrf.mxu0
        %v2134 = vadd.f32 %v2005, %v2133
        %v2135 = vpop.f32.mrf.mxu0
        %2136 = vmatprep.mubr.bf16.mxu0 0
        %2137 = vmatmul.mubr.bf16.gmra.mxu0 %v1848
        %v2138 = vpop.f32.mrf.mxu0
        %v2139 = vadd.f32 %v2010, %v2138
        %v2140 = vpop.f32.mrf.mxu0
        %v2141 = vpop.f32.mrf.mxu0
        %v2142 = vadd.f32 %v2013, %v2141
        %v2143 = vpop.f32.mrf.mxu0
        %2144 = vmatprep.mubr.bf16.mxu0 0
        %2145 = vmatmul.mubr.bf16.gmra.mxu0 %v1851
        %v2146 = vpop.f32.mrf.mxu0
        %v2147 = vadd.f32 %v2018, %v2146
        %v2148 = vpop.f32.mrf.mxu0
        %v2149 = vpop.f32.mrf.mxu0
        %v2150 = vadd.f32 %v2021, %v2149
        %v2151 = vpop.f32.mrf.mxu0
        %2152 = vmatprep.mubr.bf16.mxu0 0
        %2153 = vmatmul.mubr.bf16.gmra.mxu0 %v1854
        %v2154 = vpop.f32.mrf.mxu0
        %v2155 = vadd.f32 %v2026, %v2154
        %v2156 = vpop.f32.mrf.mxu0
        %v2157 = vpop.f32.mrf.mxu0
        %v2158 = vadd.f32 %v2029, %v2157
        %v2159 = vpop.f32.mrf.mxu0
        %2160 = vmatprep.mubr.bf16.mxu0 0
        %2161 = vmatmul.mubr.bf16.gmra.mxu0 %v1857
        %v2162 = vpop.f32.mrf.mxu0
        %v2163 = vadd.f32 %v2034, %v2162
        %v2164 = vpop.f32.mrf.mxu0
        %v2165 = vpop.f32.mrf.mxu0
        %v2166 = vadd.f32 %v2037, %v2165
        %v2167 = vpop.f32.mrf.mxu0
        %2168 = vmatprep.mubr.bf16.mxu0 0
        %2169 = vmatmul.mubr.bf16.gmra.mxu0 %v1860
        %v2170 = vpop.f32.mrf.mxu0
        %v2171 = vadd.f32 %v2042, %v2170
        %v2172 = vpop.f32.mrf.mxu0
        %v2173 = vpop.f32.mrf.mxu0
        %v2174 = vadd.f32 %v2045, %v2173
        %v2175 = vpop.f32.mrf.mxu0
        %2176 = vmatprep.mubr.bf16.mxu0 0
        %2177 = vmatmul.mubr.bf16.gmra.mxu0 %v1863
        %v2178 = vpop.f32.mrf.mxu0
        %v2179 = vadd.f32 %v2050, %v2178
        %v2180 = vpop.f32.mrf.mxu0
        %v2181 = vpop.f32.mrf.mxu0
        %v2182 = vadd.f32 %v2053, %v2181
        %v2183 = vpop.f32.mrf.mxu0
        %2184 = vmatprep.mubr.bf16.mxu0 0
        %2185 = vmatmul.mubr.bf16.gmra.mxu0 %v1866
        %v2186 = vpop.f32.mrf.mxu0
        %v2187 = vadd.f32 %v2058, %v2186
        %v2188 = vpop.f32.mrf.mxu0
        %v2189 = vpop.f32.mrf.mxu0
        %v2190 = vadd.f32 %v2061, %v2189
        %v2191 = vpop.f32.mrf.mxu0
        %2192 = vmatprep.mubr.bf16.mxu0 0
        %2193 = vmatmul.mubr.bf16.gmra.mxu0 %v1869
        %v2194 = vpop.f32.mrf.mxu0
        %v2195 = vadd.f32 %v2066, %v2194
        %v2196 = vpop.f32.mrf.mxu0
        %v2197 = vpop.f32.mrf.mxu0
        %v2198 = vadd.f32 %v2069, %v2197
        %v2199 = vpop.f32.mrf.mxu0
        %2200 = vdwg.mxu0
        %v2201 = vrcp.pop %v1741
        %v2202 = vrcp.pop %v1745
        %v2203 = vrcp.pop %v1749
        %v2204 = vrcp.pop %v1753
        %v2205 = vrcp.pop %v1757
        %v2206 = vrcp.pop %v1761
        %v2207 = vrcp.pop %v1765
        %v2208 = vrcp.pop %v1769
        %v2209 = vrcp.pop %v1773
        %v2210 = vrcp.pop %v1777
        %v2211 = vrcp.pop %v1781
        %v2212 = vrcp.pop %v1785
        %v2213 = vrcp.pop %v1789
        %v2214 = vrcp.pop %v1793
        %v2215 = vrcp.pop %v1797
        %v2216 = vrcp.pop %v1801
        %v2217 = vrcp.pop %v1805
        %v2218 = vrcp.pop %v1809
        %v2219 = vrcp.pop %v1813
        %v2220 = vrcp.pop %v1817
        %v2221 = vrcp.pop %v1821
        %v2222 = vrcp.pop %v1825
        %v2223 = vrcp.pop %v1829
        %v2224 = vrcp.pop %v1833
        %v2225 = vmul.f32 %v2107, %v2201
        %v2226 = vmul.f32 %v2110, %v2202
        %v2227 = vmul.f32 %v2115, %v2203
        %v2228 = vmul.f32 %v2118, %v2204
        %v2229 = vmul.f32 %v2123, %v2205
        %v2230 = vmul.f32 %v2126, %v2206
        %v2231 = vmul.f32 %v2131, %v2207
        %v2232 = vmul.f32 %v2134, %v2208
        %v2233 = vmul.f32 %v2139, %v2209
        %v2234 = vmul.f32 %v2142, %v2210
        %v2235 = vmul.f32 %v2147, %v2211
        %v2236 = vmul.f32 %v2150, %v2212
        %v2237 = vmul.f32 %v2155, %v2213
        %v2238 = vmul.f32 %v2158, %v2214
        %v2239 = vmul.f32 %v2163, %v2215
        %v2240 = vmul.f32 %v2166, %v2216
        %v2241 = vmul.f32 %v2171, %v2217
        %v2242 = vmul.f32 %v2174, %v2218
        %v2243 = vmul.f32 %v2179, %v2219
        %v2244 = vmul.f32 %v2182, %v2220
        %v2245 = vmul.f32 %v2187, %v2221
        %v2246 = vmul.f32 %v2190, %v2222
        %v2247 = vmul.f32 %v2195, %v2223
        %v2248 = vmul.f32 %v2198, %v2224
        %s2249 = scalar_lea.vmem %s260, 192 [#allocation6]
        %2250 = vst.msk [vmem:[%s2249] sm:$0xff] %vm1256, %v2225
        %2251 = vst.msk [vmem:[%s2249 + $0x8] sm:$0xff] %vm1256, %v2226
        %2252 = vst.msk [vmem:[%s2249 + $0x10] sm:$0xff] %vm1256, %v2227
        %2253 = vst.msk [vmem:[%s2249 + $0x18] sm:$0xff] %vm1256, %v2228
        %2254 = vst.msk [vmem:[%s2249 + $0x20] sm:$0xff] %vm1256, %v2229
        %2255 = vst.msk [vmem:[%s2249 + $0x28] sm:$0xff] %vm1256, %v2230
        %2256 = vst.msk [vmem:[%s2249 + $0x30] sm:$0xff] %vm1256, %v2231
        %2257 = vst.msk [vmem:[%s2249 + $0x38] sm:$0xff] %vm1256, %v2232
        %2258 = vst.msk [vmem:[%s2249 + $0x40] sm:$0xff] %vm1256, %v2233
        %2259 = vst.msk [vmem:[%s2249 + $0x48] sm:$0xff] %vm1256, %v2234
        %2260 = vst.msk [vmem:[%s2249 + $0x50] sm:$0xff] %vm1256, %v2235
        %2261 = vst.msk [vmem:[%s2249 + $0x58] sm:$0xff] %vm1256, %v2236
        %2262 = vst.msk [vmem:[%s2249 + $0x60] sm:$0xff] %vm1256, %v2237
        %2263 = vst.msk [vmem:[%s2249 + $0x68] sm:$0xff] %vm1256, %v2238
        %2264 = vst.msk [vmem:[%s2249 + $0x70] sm:$0xff] %vm1256, %v2239
        %2265 = vst.msk [vmem:[%s2249 + $0x78] sm:$0xff] %vm1256, %v2240
        %2266 = vst.msk [vmem:[%s2249 + $0x80] sm:$0xff] %vm1256, %v2241
        %2267 = vst.msk [vmem:[%s2249 + $0x88] sm:$0xff] %vm1256, %v2242
        %2268 = vst.msk [vmem:[%s2249 + $0x90] sm:$0xff] %vm1256, %v2243
        %2269 = vst.msk [vmem:[%s2249 + $0x98] sm:$0xff] %vm1256, %v2244
        %2270 = vst.msk [vmem:[%s2249 + $0xa0] sm:$0xff] %vm1256, %v2245
        %2271 = vst.msk [vmem:[%s2249 + $0xa8] sm:$0xff] %vm1256, %v2246
        %2272 = vst.msk [vmem:[%s2249 + $0xb0] sm:$0xff] %vm1256, %v2247
        %2273 = vst.msk [vmem:[%s2249 + $0xb8] sm:$0xff] %vm1256, %v2248
        %s2274 = sand.u32 %s115, 1
        %s2275 = sand.u32 %s115, 1
        %s2276 = smul.addr %s2275, 384
        %s2277 = scalar_lea.vmem [#allocation6], %s2276
        // Predicated region
        $region41: #{tpu_custom_call.1} parent=31 // pred_check
          %p2278 = pneg %p125
        $region42: #{tpu_custom_call.1} parent=31 // pred_check_branch
          %2280 = sbr.rel (%p2278) target = $region44
        $region43: #{tpu_custom_call.1} parent=31 // pred_region
          %s2281 = smul.u32 2, %s22
          %s2282 = smul.u32 24, %s23
          %s2283 = smul.addr %s2281, 48
          %s2284 = sadd.s32 %s2282, %s2283
          %s2285 = smul.addr %s2284, 8
          %s2286 = scalar_lea.vmem %s3, %s2285
          // Predicated region
          $region45: #{tpu_custom_call.1} parent=43 // pred_check
            _
          $region46: #{tpu_custom_call.1} parent=43 // pred_check_branch
            %2288 = sbr.rel (0) target = $region48
          $region47: #{tpu_custom_call.1} parent=43 // pred_region
            // Predicated region
            $region49: #{tpu_custom_call.1} parent=47 // pred_check
              _
            $region50: #{tpu_custom_call.1} parent=47 // pred_check_branch
              %2290 = sbr.rel (0) target = $region52
            $region51: #{tpu_custom_call.1} parent=47 // pred_region
              // Predicated region
              $region64: #{tpu_custom_call.1} parent=51 // pred_check
                _
              $region65: #{tpu_custom_call.1} parent=51 // pred_check_branch
                %2400 = sbr.rel (0) target = $region67
              $region66: #{tpu_custom_call.1} parent=51 // pred_region
                loop: start=0, step=1, limit=1
                $region68: #{tpu_custom_call.1} parent=66 // loop_pre_header
                  _
                $region69: #{tpu_custom_call.1} parent=66 // loop_header
                  %s2402 = sphi 0, %s2406
                  %p2403 = scmp.ge.s32.totalorder %s2402, 1
                  %s2407 = sphi %s2277, %s2277
                  %s2408 = sphi %s2286, %s2286
                $region70: #{tpu_custom_call.1} parent=66 // loop_header_branch
                  %2405 = sbr.rel (%p2403) target = $region74
                $region71: #{tpu_custom_call.1} parent=66 // loop_body
                  %v2409 = vld [vmem:[%s2407] sm:$0xff]
                  %2410 = vst [vmem:[%s2408] sm:$0xff] %v2409
                  %v2411 = vld [vmem:[%s2407 + $0x8] sm:$0xff]
                  %2412 = vst [vmem:[%s2408 + $0x8] sm:$0xff] %v2411
                  %v2413 = vld [vmem:[%s2407 + $0x10] sm:$0xff]
                  %2414 = vst [vmem:[%s2408 + $0x10] sm:$0xff] %v2413
                  %v2415 = vld [vmem:[%s2407 + $0x18] sm:$0xff]
                  %2416 = vst [vmem:[%s2408 + $0x18] sm:$0xff] %v2415
                  %v2417 = vld [vmem:[%s2407 + $0x20] sm:$0xff]
                  %2418 = vst [vmem:[%s2408 + $0x20] sm:$0xff] %v2417
                  %v2419 = vld [vmem:[%s2407 + $0x28] sm:$0xff]
                  %2420 = vst [vmem:[%s2408 + $0x28] sm:$0xff] %v2419
                  %v2421 = vld [vmem:[%s2407 + $0x30] sm:$0xff]
                  %2422 = vst [vmem:[%s2408 + $0x30] sm:$0xff] %v2421
                  %v2423 = vld [vmem:[%s2407 + $0x38] sm:$0xff]
                  %2424 = vst [vmem:[%s2408 + $0x38] sm:$0xff] %v2423
                  %v2425 = vld [vmem:[%s2407 + $0x40] sm:$0xff]
                  %2426 = vst [vmem:[%s2408 + $0x40] sm:$0xff] %v2425
                  %v2427 = vld [vmem:[%s2407 + $0x48] sm:$0xff]
                  %2428 = vst [vmem:[%s2408 + $0x48] sm:$0xff] %v2427
                  %v2429 = vld [vmem:[%s2407 + $0x50] sm:$0xff]
                  %2430 = vst [vmem:[%s2408 + $0x50] sm:$0xff] %v2429
                  %v2431 = vld [vmem:[%s2407 + $0x58] sm:$0xff]
                  %2432 = vst [vmem:[%s2408 + $0x58] sm:$0xff] %v2431
                  %v2433 = vld [vmem:[%s2407 + $0x60] sm:$0xff]
                  %2434 = vst [vmem:[%s2408 + $0x60] sm:$0xff] %v2433
                  %v2435 = vld [vmem:[%s2407 + $0x68] sm:$0xff]
                  %2436 = vst [vmem:[%s2408 + $0x68] sm:$0xff] %v2435
                  %v2437 = vld [vmem:[%s2407 + $0x70] sm:$0xff]
                  %2438 = vst [vmem:[%s2408 + $0x70] sm:$0xff] %v2437
                  %v2439 = vld [vmem:[%s2407 + $0x78] sm:$0xff]
                  %2440 = vst [vmem:[%s2408 + $0x78] sm:$0xff] %v2439
                  %v2441 = vld [vmem:[%s2407 + $0x80] sm:$0xff]
                  %2442 = vst [vmem:[%s2408 + $0x80] sm:$0xff] %v2441
                  %v2443 = vld [vmem:[%s2407 + $0x88] sm:$0xff]
                  %2444 = vst [vmem:[%s2408 + $0x88] sm:$0xff] %v2443
                  %v2445 = vld [vmem:[%s2407 + $0x90] sm:$0xff]
                  %2446 = vst [vmem:[%s2408 + $0x90] sm:$0xff] %v2445
                  %v2447 = vld [vmem:[%s2407 + $0x98] sm:$0xff]
                  %2448 = vst [vmem:[%s2408 + $0x98] sm:$0xff] %v2447
                  %v2449 = vld [vmem:[%s2407 + $0xa0] sm:$0xff]
                  %2450 = vst [vmem:[%s2408 + $0xa0] sm:$0xff] %v2449
                  %v2451 = vld [vmem:[%s2407 + $0xa8] sm:$0xff]
                  %2452 = vst [vmem:[%s2408 + $0xa8] sm:$0xff] %v2451
                  %v2453 = vld [vmem:[%s2407 + $0xb0] sm:$0xff]
                  %2454 = vst [vmem:[%s2408 + $0xb0] sm:$0xff] %v2453
                  %v2455 = vld [vmem:[%s2407 + $0xb8] sm:$0xff]
                  %2456 = vst [vmem:[%s2408 + $0xb8] sm:$0xff] %v2455
                  %v2457 = vld [vmem:[%s2407 + $0xc0] sm:$0xff]
                  %2458 = vst [vmem:[%s2408 + $0x180] sm:$0xff] %v2457
                  %v2459 = vld [vmem:[%s2407 + $0xc8] sm:$0xff]
                  %2460 = vst [vmem:[%s2408 + $0x188] sm:$0xff] %v2459
                  %v2461 = vld [vmem:[%s2407 + $0xd0] sm:$0xff]
                  %2462 = vst [vmem:[%s2408 + $0x190] sm:$0xff] %v2461
                  %v2463 = vld [vmem:[%s2407 + $0xd8] sm:$0xff]
                  %2464 = vst [vmem:[%s2408 + $0x198] sm:$0xff] %v2463
                  %v2465 = vld [vmem:[%s2407 + $0xe0] sm:$0xff]
                  %2466 = vst [vmem:[%s2408 + $0x1a0] sm:$0xff] %v2465
                  %v2467 = vld [vmem:[%s2407 + $0xe8] sm:$0xff]
                  %2468 = vst [vmem:[%s2408 + $0x1a8] sm:$0xff] %v2467
                  %v2469 = vld [vmem:[%s2407 + $0xf0] sm:$0xff]
                  %2470 = vst [vmem:[%s2408 + $0x1b0] sm:$0xff] %v2469
                  %v2471 = vld [vmem:[%s2407 + $0xf8] sm:$0xff]
                  %2472 = vst [vmem:[%s2408 + $0x1b8] sm:$0xff] %v2471
                  %v2473 = vld [vmem:[%s2407 + $0x100] sm:$0xff]
                  %2474 = vst [vmem:[%s2408 + $0x1c0] sm:$0xff] %v2473
                  %v2475 = vld [vmem:[%s2407 + $0x108] sm:$0xff]
                  %2476 = vst [vmem:[%s2408 + $0x1c8] sm:$0xff] %v2475
                  %v2477 = vld [vmem:[%s2407 + $0x110] sm:$0xff]
                  %2478 = vst [vmem:[%s2408 + $0x1d0] sm:$0xff] %v2477
                  %v2479 = vld [vmem:[%s2407 + $0x118] sm:$0xff]
                  %2480 = vst [vmem:[%s2408 + $0x1d8] sm:$0xff] %v2479
                  %v2481 = vld [vmem:[%s2407 + $0x120] sm:$0xff]
                  %2482 = vst [vmem:[%s2408 + $0x1e0] sm:$0xff] %v2481
                  %v2483 = vld [vmem:[%s2407 + $0x128] sm:$0xff]
                  %2484 = vst [vmem:[%s2408 + $0x1e8] sm:$0xff] %v2483
                  %v2485 = vld [vmem:[%s2407 + $0x130] sm:$0xff]
                  %2486 = vst [vmem:[%s2408 + $0x1f0] sm:$0xff] %v2485
                  %v2487 = vld [vmem:[%s2407 + $0x138] sm:$0xff]
                  %2488 = vst [vmem:[%s2408 + $0x1f8] sm:$0xff] %v2487
                  %v2489 = vld [vmem:[%s2407 + $0x140] sm:$0xff]
                  %2490 = vst [vmem:[%s2408 + $0x200] sm:$0xff] %v2489
                  %v2491 = vld [vmem:[%s2407 + $0x148] sm:$0xff]
                  %2492 = vst [vmem:[%s2408 + $0x208] sm:$0xff] %v2491
                  %v2493 = vld [vmem:[%s2407 + $0x150] sm:$0xff]
                  %2494 = vst [vmem:[%s2408 + $0x210] sm:$0xff] %v2493
                  %v2495 = vld [vmem:[%s2407 + $0x158] sm:$0xff]
                  %2496 = vst [vmem:[%s2408 + $0x218] sm:$0xff] %v2495
                  %v2497 = vld [vmem:[%s2407 + $0x160] sm:$0xff]
                  %2498 = vst [vmem:[%s2408 + $0x220] sm:$0xff] %v2497
                  %v2499 = vld [vmem:[%s2407 + $0x168] sm:$0xff]
                  %2500 = vst [vmem:[%s2408 + $0x228] sm:$0xff] %v2499
                  %v2501 = vld [vmem:[%s2407 + $0x170] sm:$0xff]
                  %2502 = vst [vmem:[%s2408 + $0x230] sm:$0xff] %v2501
                  %v2503 = vld [vmem:[%s2407 + $0x178] sm:$0xff]
                  %2504 = vst [vmem:[%s2408 + $0x238] sm:$0xff] %v2503
                $region72: #{tpu_custom_call.1} parent=66 // loop_footer
                  %s2406 = sadd.s32 1, %s2402
                $region73: #{tpu_custom_call.1} parent=66 // loop_footer_branch
                  %2401 = sbr.rel target = $region69
                $region74: #{tpu_custom_call.1} parent=66 // loop_exit
                  _
              $region67: #{tpu_custom_call.1} parent=51 // pred_fallthru
                _
              // Predicated region
              $region75: #{tpu_custom_call.1} parent=51 // pred_check
                _
              $region76: #{tpu_custom_call.1} parent=51 // pred_check_branch
                %2506 = sbr.rel target = $region78
              $region77: #{tpu_custom_call.1} parent=51 // pred_region
                _
              $region78: #{tpu_custom_call.1} parent=51 // pred_fallthru
                _
            $region52: #{tpu_custom_call.1} parent=47 // pred_fallthru
              _
            // Predicated region
            $region53: #{tpu_custom_call.1} parent=47 // pred_check
              _
            $region54: #{tpu_custom_call.1} parent=47 // pred_check_branch
              %2292 = sbr.rel target = $region56
            $region55: #{tpu_custom_call.1} parent=47 // pred_region
              %s2294 = ssub.s32 256, 1
              loop: start=0, step=1, limit=1
              $region57: #{tpu_custom_call.1} parent=55 // loop_pre_header
                _
              $region58: #{tpu_custom_call.1} parent=55 // loop_header
                %s2296 = sphi 0, %s2300
                %p2297 = scmp.ge.s32.totalorder %s2296, 1
                %s2301 = sphi %s2277, %s2277
                %s2302 = sphi %s2286, %s2286
              $region59: #{tpu_custom_call.1} parent=55 // loop_header_branch
                %2299 = sbr.rel (%p2297) target = $region63
              $region60: #{tpu_custom_call.1} parent=55 // loop_body
                %v2303 = vld [vmem:[%s2301] sm:%s2294]
                %2304 = vst [vmem:[%s2302] sm:%s2294] %v2303
                %v2305 = vld [vmem:[%s2301 + $0x8] sm:%s2294]
                %2306 = vst [vmem:[%s2302 + $0x8] sm:%s2294] %v2305
                %v2307 = vld [vmem:[%s2301 + $0x10] sm:%s2294]
                %2308 = vst [vmem:[%s2302 + $0x10] sm:%s2294] %v2307
                %v2309 = vld [vmem:[%s2301 + $0x18] sm:%s2294]
                %2310 = vst [vmem:[%s2302 + $0x18] sm:%s2294] %v2309
                %v2311 = vld [vmem:[%s2301 + $0x20] sm:%s2294]
                %2312 = vst [vmem:[%s2302 + $0x20] sm:%s2294] %v2311
                %v2313 = vld [vmem:[%s2301 + $0x28] sm:%s2294]
                %2314 = vst [vmem:[%s2302 + $0x28] sm:%s2294] %v2313
                %v2315 = vld [vmem:[%s2301 + $0x30] sm:%s2294]
                %2316 = vst [vmem:[%s2302 + $0x30] sm:%s2294] %v2315
                %v2317 = vld [vmem:[%s2301 + $0x38] sm:%s2294]
                %2318 = vst [vmem:[%s2302 + $0x38] sm:%s2294] %v2317
                %v2319 = vld [vmem:[%s2301 + $0x40] sm:%s2294]
                %2320 = vst [vmem:[%s2302 + $0x40] sm:%s2294] %v2319
                %v2321 = vld [vmem:[%s2301 + $0x48] sm:%s2294]
                %2322 = vst [vmem:[%s2302 + $0x48] sm:%s2294] %v2321
                %v2323 = vld [vmem:[%s2301 + $0x50] sm:%s2294]
                %2324 = vst [vmem:[%s2302 + $0x50] sm:%s2294] %v2323
                %v2325 = vld [vmem:[%s2301 + $0x58] sm:%s2294]
                %2326 = vst [vmem:[%s2302 + $0x58] sm:%s2294] %v2325
                %v2327 = vld [vmem:[%s2301 + $0x60] sm:%s2294]
                %2328 = vst [vmem:[%s2302 + $0x60] sm:%s2294] %v2327
                %v2329 = vld [vmem:[%s2301 + $0x68] sm:%s2294]
                %2330 = vst [vmem:[%s2302 + $0x68] sm:%s2294] %v2329
                %v2331 = vld [vmem:[%s2301 + $0x70] sm:%s2294]
                %2332 = vst [vmem:[%s2302 + $0x70] sm:%s2294] %v2331
                %v2333 = vld [vmem:[%s2301 + $0x78] sm:%s2294]
                %2334 = vst [vmem:[%s2302 + $0x78] sm:%s2294] %v2333
                %v2335 = vld [vmem:[%s2301 + $0x80] sm:%s2294]
                %2336 = vst [vmem:[%s2302 + $0x80] sm:%s2294] %v2335
                %v2337 = vld [vmem:[%s2301 + $0x88] sm:%s2294]
                %2338 = vst [vmem:[%s2302 + $0x88] sm:%s2294] %v2337
                %v2339 = vld [vmem:[%s2301 + $0x90] sm:%s2294]
                %2340 = vst [vmem:[%s2302 + $0x90] sm:%s2294] %v2339
                %v2341 = vld [vmem:[%s2301 + $0x98] sm:%s2294]
                %2342 = vst [vmem:[%s2302 + $0x98] sm:%s2294] %v2341
                %v2343 = vld [vmem:[%s2301 + $0xa0] sm:%s2294]
                %2344 = vst [vmem:[%s2302 + $0xa0] sm:%s2294] %v2343
                %v2345 = vld [vmem:[%s2301 + $0xa8] sm:%s2294]
                %2346 = vst [vmem:[%s2302 + $0xa8] sm:%s2294] %v2345
                %v2347 = vld [vmem:[%s2301 + $0xb0] sm:%s2294]
                %2348 = vst [vmem:[%s2302 + $0xb0] sm:%s2294] %v2347
                %v2349 = vld [vmem:[%s2301 + $0xb8] sm:%s2294]
                %2350 = vst [vmem:[%s2302 + $0xb8] sm:%s2294] %v2349
                %v2351 = vld [vmem:[%s2301 + $0xc0] sm:%s2294]
                %2352 = vst [vmem:[%s2302 + $0x180] sm:%s2294] %v2351
                %v2353 = vld [vmem:[%s2301 + $0xc8] sm:%s2294]
                %2354 = vst [vmem:[%s2302 + $0x188] sm:%s2294] %v2353
                %v2355 = vld [vmem:[%s2301 + $0xd0] sm:%s2294]
                %2356 = vst [vmem:[%s2302 + $0x190] sm:%s2294] %v2355
                %v2357 = vld [vmem:[%s2301 + $0xd8] sm:%s2294]
                %2358 = vst [vmem:[%s2302 + $0x198] sm:%s2294] %v2357
                %v2359 = vld [vmem:[%s2301 + $0xe0] sm:%s2294]
                %2360 = vst [vmem:[%s2302 + $0x1a0] sm:%s2294] %v2359
                %v2361 = vld [vmem:[%s2301 + $0xe8] sm:%s2294]
                %2362 = vst [vmem:[%s2302 + $0x1a8] sm:%s2294] %v2361
                %v2363 = vld [vmem:[%s2301 + $0xf0] sm:%s2294]
                %2364 = vst [vmem:[%s2302 + $0x1b0] sm:%s2294] %v2363
                %v2365 = vld [vmem:[%s2301 + $0xf8] sm:%s2294]
                %2366 = vst [vmem:[%s2302 + $0x1b8] sm:%s2294] %v2365
                %v2367 = vld [vmem:[%s2301 + $0x100] sm:%s2294]
                %2368 = vst [vmem:[%s2302 + $0x1c0] sm:%s2294] %v2367
                %v2369 = vld [vmem:[%s2301 + $0x108] sm:%s2294]
                %2370 = vst [vmem:[%s2302 + $0x1c8] sm:%s2294] %v2369
                %v2371 = vld [vmem:[%s2301 + $0x110] sm:%s2294]
                %2372 = vst [vmem:[%s2302 + $0x1d0] sm:%s2294] %v2371
                %v2373 = vld [vmem:[%s2301 + $0x118] sm:%s2294]
                %2374 = vst [vmem:[%s2302 + $0x1d8] sm:%s2294] %v2373
                %v2375 = vld [vmem:[%s2301 + $0x120] sm:%s2294]
                %2376 = vst [vmem:[%s2302 + $0x1e0] sm:%s2294] %v2375
                %v2377 = vld [vmem:[%s2301 + $0x128] sm:%s2294]
                %2378 = vst [vmem:[%s2302 + $0x1e8] sm:%s2294] %v2377
                %v2379 = vld [vmem:[%s2301 + $0x130] sm:%s2294]
                %2380 = vst [vmem:[%s2302 + $0x1f0] sm:%s2294] %v2379
                %v2381 = vld [vmem:[%s2301 + $0x138] sm:%s2294]
                %2382 = vst [vmem:[%s2302 + $0x1f8] sm:%s2294] %v2381
                %v2383 = vld [vmem:[%s2301 + $0x140] sm:%s2294]
                %2384 = vst [vmem:[%s2302 + $0x200] sm:%s2294] %v2383
                %v2385 = vld [vmem:[%s2301 + $0x148] sm:%s2294]
                %2386 = vst [vmem:[%s2302 + $0x208] sm:%s2294] %v2385
                %v2387 = vld [vmem:[%s2301 + $0x150] sm:%s2294]
                %2388 = vst [vmem:[%s2302 + $0x210] sm:%s2294] %v2387
                %v2389 = vld [vmem:[%s2301 + $0x158] sm:%s2294]
                %2390 = vst [vmem:[%s2302 + $0x218] sm:%s2294] %v2389
                %v2391 = vld [vmem:[%s2301 + $0x160] sm:%s2294]
                %2392 = vst [vmem:[%s2302 + $0x220] sm:%s2294] %v2391
                %v2393 = vld [vmem:[%s2301 + $0x168] sm:%s2294]
                %2394 = vst [vmem:[%s2302 + $0x228] sm:%s2294] %v2393
                %v2395 = vld [vmem:[%s2301 + $0x170] sm:%s2294]
                %2396 = vst [vmem:[%s2302 + $0x230] sm:%s2294] %v2395
                %v2397 = vld [vmem:[%s2301 + $0x178] sm:%s2294]
                %2398 = vst [vmem:[%s2302 + $0x238] sm:%s2294] %v2397
              $region61: #{tpu_custom_call.1} parent=55 // loop_footer
                %s2300 = sadd.s32 1, %s2296
              $region62: #{tpu_custom_call.1} parent=55 // loop_footer_branch
                %2295 = sbr.rel target = $region58
              $region63: #{tpu_custom_call.1} parent=55 // loop_exit
                _
            $region56: #{tpu_custom_call.1} parent=47 // pred_fallthru
              _
          $region48: #{tpu_custom_call.1} parent=43 // pred_fallthru
            _
          %2507 = vnop
        $region44: #{tpu_custom_call.1} parent=31 // pred_fallthru
          _
      $region32: #{tpu_custom_call.1} parent=5 // pred_fallthru
        _
      %p2508 = scmp.le.s32.totalorder 2, %s13
      // Predicated region
      $region79: #{tpu_custom_call.1} parent=5 // pred_check
        %p2509 = pneg %p2508
      $region80: #{tpu_custom_call.1} parent=5 // pred_check_branch
        %2511 = sbr.rel (%p2509) target = $region82
      $region81: #{tpu_custom_call.1} parent=5 // pred_region
        %s2512 = ssub.s32 %s13, 2
        // Predicated region
        $region83: #{tpu_custom_call.1} parent=81 // pred_check
          %p2513 = pneg %p131
        $region84: #{tpu_custom_call.1} parent=81 // pred_check_branch
          %2515 = sbr.rel (%p2513) target = $region86
        $region85: #{tpu_custom_call.1} parent=81 // pred_region
          %s2516 = sand.u32 %s116, 1
          %s2517 = sand.u32 %s116, 1
          %s2518 = smul.addr %s2517, 384
          %s2519 = scalar_lea.vmem [#allocation6], %s2518
        $region86: #{tpu_custom_call.1} parent=81 // pred_fallthru
          _
      $region82: #{tpu_custom_call.1} parent=5 // pred_fallthru
        _
    $region6: #{tpu_custom_call.1} parent=1 // loop_footer
      %s17 = sadd.s32 1, %s13
    $region7: #{tpu_custom_call.1} parent=1 // loop_footer_branch
      %12 = sbr.rel target = $region3
    $region8: #{tpu_custom_call.1} parent=1 // loop_exit
      _
    %2520 = vsyncpa [#allocation3], 1
    %s2521 = scalar_lea.sflag [#allocation3], 1
    %2522 = vsyncpa %s2521, 1
    %2523 = vsyncpa [#allocation5], 1
    %s2524 = scalar_lea.sflag [#allocation5], 1
    %2525 = vsyncpa %s2524, 1

</llo_original>
